<compile_context>
chip_gen: v7x
topology: tpu7x:2x2x1
jax: 0.10.0
libtpu: 0.0.40
codegen_flags: <defaults>
</compile_context>

<pallas_src>
import jax
import jax.numpy as jnp
from jax.experimental import pallas as pl
from jax.experimental.pallas import tpu as pltpu

EPS = 1e-5


def bn_add_relu_kernel(x_ref, res_ref, gb_ref, o_ref):
    # x_ref, res_ref, o_ref: (CB, L)   gb_ref: (CB, 2) = [gamma | beta]
    x = x_ref[...].astype(jnp.float32)
    res = res_ref[...].astype(jnp.float32)

    inv_l = jnp.float32(1.0 / x.shape[-1])

    # Two-pass per-channel batch statistics over the H*W (lane) axis.
    mean = jnp.sum(x, axis=-1, keepdims=True) * inv_l
    centered = x - mean
    var = jnp.sum(centered * centered, axis=-1, keepdims=True) * inv_l
    inv_std = jax.lax.rsqrt(var + jnp.float32(EPS))

    gamma = gb_ref[:, 0:1]
    beta = gb_ref[:, 1:2]

    # y = (x - mean) * (gamma / std) + beta + res ; out = relu(y)
    y = centered * (gamma * inv_std) + beta + res
    o_ref[...] = jnp.maximum(y, 0.0).astype(o_ref.dtype)


@jax.jit
def bn_add_relu(x_nchw, res_nchw, gamma, beta):
    N, C, H, W = x_nchw.shape
    L = N * H * W

    if N == 1:
        # Pure reshape: no HBM transpose can be materialized.
        x2d = x_nchw.reshape(C, L)
        r2d = res_nchw.reshape(C, L)
    else:
        # TODO(synk): for N > 1 fold N into the grid (3-D blocks + VMEM stat
        # accumulator) instead of this host-side transpose, which can
        # materialize an HBM copy.
        x2d = jnp.transpose(x_nchw, (1, 0, 2, 3)).reshape(C, L)
        r2d = jnp.transpose(res_nchw, (1, 0, 2, 3)).reshape(C, L)

    # Pack the affine params into one (C, 2) operand: a single narrow DMA.
    gb = jnp.stack(
        [gamma.astype(jnp.float32), beta.astype(jnp.float32)], axis=1)

    # Channel tile: sublane-aligned; for C=696 this gives cdiv(696,176)=4 grid
    # steps (even count -> clean dual-TC split on v7x, pipelined everywhere).
    # The full lane axis stays in-block so stats are single-pass per block.
    CB = 176 if C > 176 else C
    grid = (pl.cdiv(C, CB),)

    out2d = pl.pallas_call(
        bn_add_relu_kernel,
        out_shape=jax.ShapeDtypeStruct((C, L), x_nchw.dtype),
        grid=grid,
        in_specs=[
            pl.BlockSpec((CB, L), lambda i: (i, 0)),
            pl.BlockSpec((CB, L), lambda i: (i, 0)),
            pl.BlockSpec((CB, 2), lambda i: (i, 0)),
        ],
        out_specs=pl.BlockSpec((CB, L), lambda i: (i, 0)),
        input_output_aliases={0: 0},
        compiler_params=pltpu.CompilerParams(
            dimension_semantics=("parallel",)),
    )(x2d, r2d, gb)

    if N == 1:
        return out2d.reshape(N, C, H, W)
    return jnp.transpose(out2d.reshape(C, N, H, W), (1, 0, 2, 3))


def reference(x, res, gamma, beta):
    mean = jnp.mean(x, axis=(0, 2, 3), keepdims=True)
    var = jnp.mean((x - mean) ** 2, axis=(0, 2, 3), keepdims=True)
    xhat = (x - mean) / jnp.sqrt(var + EPS)
    y = xhat * gamma[None, :, None, None] + beta[None, :, None, None]
    return jnp.maximum(y + res, 0.0)


if __name__ == "__main__":
    # Module shape: BatchNorm2d(696) applied to (1, 696, 28, 28).
    N, C, H, W = 1, 696, 28, 28

    key = jax.random.PRNGKey(0)
    k1, k2, k3, k4 = jax.random.split(key, 4)
    x100 = jax.random.normal(k1, (N, C, H, W), dtype=jnp.float32)
    x87 = jax.random.normal(k2, (N, C, H, W), dtype=jnp.float32)
    gamma = 1.0 + 0.1 * jax.random.normal(k3, (C,), dtype=jnp.float32)
    beta = 0.1 * jax.random.normal(k4, (C,), dtype=jnp.float32)

    out = bn_add_relu(x100, x87, gamma, beta)
    out = jax.block_until_ready(out)

    ref = reference(x100, x87, gamma, beta)
    assert out.shape == (N, C, H, W)
    assert jnp.allclose(out, ref, rtol=1e-5, atol=1e-5), "mismatch vs reference"

    print("KERNEL_OK")
</pallas_src>

<mosaic_0001>
module attributes {stable_mosaic.version = 11 : i64} {
  func.func @bn_add_relu_kernel(%arg0: i32, %arg1: memref<176x784xf32, #tpu.memory_space<vmem>>, %arg2: memref<176x784xf32, #tpu.memory_space<vmem>>, %arg3: memref<176x2xf32, #tpu.memory_space<vmem>>, %arg4: memref<176x784xf32, #tpu.memory_space<vmem>>) attributes {dimension_semantics = [#tpu.dimension_semantics<parallel>], iteration_bounds = array<i64: 4>, scalar_prefetch = 0 : i64, scratch_operands = 0 : i64, tpu.core_type = #tpu.core_type<tc>, window_params = [{transform_indices = @transform_0, window_bounds = array<i64: 176, 784>}, {transform_indices = @transform_1, window_bounds = array<i64: 176, 784>}, {transform_indices = @transform_2, window_bounds = array<i64: 176, 2>}, {transform_indices = @transform_3, window_bounds = array<i64: 176, 784>}]} {
    %c0 = arith.constant 0 : index
    %c0_0 = arith.constant 0 : index
    %0 = vector.load %arg1[%c0, %c0_0] : memref<176x784xf32, #tpu.memory_space<vmem>>, vector<176x784xf32>
    %c0_1 = arith.constant 0 : index
    %c0_2 = arith.constant 0 : index
    %1 = vector.load %arg2[%c0_1, %c0_2] : memref<176x784xf32, #tpu.memory_space<vmem>>, vector<176x784xf32>
    %cst = arith.constant dense<0.000000e+00> : vector<176xf32>
    %2 = vector.multi_reduction <add>, %0, %cst [1] : vector<176x784xf32> to vector<176xf32>
    %3 = vector.shape_cast %2 : vector<176xf32> to vector<176x1xf32>
    %cst_3 = arith.constant 0.00127551018 : f32
    %4 = vector.broadcast %cst_3 : f32 to vector<176x1xf32>
    %5 = arith.mulf %3, %4 : vector<176x1xf32>
    %6 = vector.broadcast %5 : vector<176x1xf32> to vector<176x784xf32>
    %7 = arith.subf %0, %6 : vector<176x784xf32>
    %8 = arith.mulf %7, %7 : vector<176x784xf32>
    %cst_4 = arith.constant dense<0.000000e+00> : vector<176xf32>
    %9 = vector.multi_reduction <add>, %8, %cst_4 [1] : vector<176x784xf32> to vector<176xf32>
    %10 = vector.shape_cast %9 : vector<176xf32> to vector<176x1xf32>
    %cst_5 = arith.constant 0.00127551018 : f32
    %11 = vector.broadcast %cst_5 : f32 to vector<176x1xf32>
    %12 = arith.mulf %10, %11 : vector<176x1xf32>
    %cst_6 = arith.constant 9.99999974E-6 : f32
    %13 = vector.broadcast %cst_6 : f32 to vector<176x1xf32>
    %14 = arith.addf %12, %13 : vector<176x1xf32>
    %15 = math.rsqrt %14 : vector<176x1xf32>
    %c0_7 = arith.constant 0 : index
    %c0_8 = arith.constant 0 : index
    %16 = vector.load %arg3[%c0_7, %c0_8] : memref<176x2xf32, #tpu.memory_space<vmem>>, vector<176x1xf32>
    %c0_9 = arith.constant 0 : index
    %c1 = arith.constant 1 : index
    %17 = vector.load %arg3[%c0_9, %c1] : memref<176x2xf32, #tpu.memory_space<vmem>>, vector<176x1xf32>
    %18 = arith.mulf %16, %15 : vector<176x1xf32>
    %19 = vector.broadcast %18 : vector<176x1xf32> to vector<176x784xf32>
    %20 = arith.mulf %7, %19 : vector<176x784xf32>
    %21 = vector.broadcast %17 : vector<176x1xf32> to vector<176x784xf32>
    %22 = arith.addf %20, %21 : vector<176x784xf32>
    %23 = arith.addf %22, %1 : vector<176x784xf32>
    %cst_10 = arith.constant 0.000000e+00 : f32
    %24 = vector.broadcast %cst_10 : f32 to vector<176x784xf32>
    %25 = arith.maximumf %23, %24 : vector<176x784xf32>
    %c0_11 = arith.constant 0 : index
    %c0_12 = arith.constant 0 : index
    %26 = vector.load %arg4[%c0_11, %c0_12] : memref<176x784xf32, #tpu.memory_space<vmem>>, vector<176x784xf32>
    tpu.vector_store %arg4[%c0_11, %c0_12], %25 {strides = array<i32>} : memref<176x784xf32, #tpu.memory_space<vmem>>, vector<176x784xf32>,
    return
  }
  func.func @transform_0(%arg0: i32) -> (i32, i32) {
    %c0_i32 = arith.constant 0 : i32
    %c0_i32_0 = arith.constant 0 : i32
    return %arg0, %c0_i32 : i32, i32
  }
  func.func @transform_1(%arg0: i32) -> (i32, i32) {
    %c0_i32 = arith.constant 0 : i32
    %c0_i32_0 = arith.constant 0 : i32
    return %arg0, %c0_i32 : i32, i32
  }
  func.func @transform_2(%arg0: i32) -> (i32, i32) {
    %c0_i32 = arith.constant 0 : i32
    %c0_i32_0 = arith.constant 0 : i32
    return %arg0, %c0_i32 : i32, i32
  }
  func.func @transform_3(%arg0: i32) -> (i32, i32) {
    %c0_i32 = arith.constant 0 : i32
    %c0_i32_0 = arith.constant 0 : i32
    return %arg0, %c0_i32 : i32, i32
  }
}

</mosaic_0001>

<llo_original>
// kernel: bn_add_relu.1
$region0: #{bn_add_relu.1}
  #allocation0 [shape = 'u32[]', space=smem, size = 0x4, offset = 0x4, fixed_abs, tag = 'smem constant byte address 0x4 - core index']
  #allocation1 [shape = 'u32[144,128]{1,0:T(1,128)}', space=vmem, size = 0x12000, scoped, tag = 'internal scratch']
  %s0 = inlined_call_operand.vmem [shape: f32[696,784], index: 0, kind: input, shape index: {}, may-alias: {0,3}]
  %s1 = inlined_call_operand.vmem [shape: f32[696,784], index: 1, kind: input, shape index: {}]
  %s2 = inlined_call_operand.vmem [shape: f32[696,2], index: 2, kind: input, shape index: {}]
  %s3 = inlined_call_operand.vmem [shape: f32[696,784], index: 3, kind: output, shape index: {}, may-alias: {0,3}]
  %s4 = sld [smem:[#allocation0]]
  $region71: #{bn_add_relu.1} parent=0
    _
  %s6 = ssub.s32 1, %s4
  %s7 = scalar_select 0, %s6, %s4
  $region1: #{bn_add_relu.1} parent=0
    #allocation2 [shape = 'u8[1261568]{0}', space=vmem, size = 0x134000, scoped, tag = 'output window, operand 0']
    loop: start=0, step=1, limit=6
    $region2: #{bn_add_relu.1} parent=1 // loop_pre_header
      _
    $region3: #{bn_add_relu.1} parent=1 // loop_header
      %s9 = sphi 0, %s13
      %p10 = scmp.ge.s32.totalorder %s9, 6
      %s19 = sphi 0, %s21
      %s22 = sphi 0, %s19
      %s23 = sphi 0, %s22
      %s39 = sphi 0, %s23
      %s45 = sphi 0, %s47
      %s48 = sphi 0, %s45
      %s49 = sphi 0, %s48
      %s65 = sphi 0, %s49
      %s71 = sphi 0, %s73
      %s74 = sphi 0, %s71
      %s75 = sphi 0, %s74
      %s91 = sphi 0, %s75
      %s97 = sphi 0, %s99
      %s100 = sphi 0, %s97
      %s101 = sphi 0, %s100
      %s117 = sphi 0, %s101
    $region4: #{bn_add_relu.1} parent=1 // loop_header_branch
      %12 = sbr.rel (%p10) target = $region8
    $region5: #{bn_add_relu.1} parent=1 // loop_body
      %s14 = ssub.s32 %s9, 1
      %s15 = ssub.s32 %s9, 2
      %s16 = sadd.s32 %s9, 1
      %s17 = ssub.s32 %s9, %s16
      %p18 = scmp.eq.s32.totalorder %s17, 0
      %s20 = sadd.s32 %s19, 1
      %s21 = scalar_select %p18, %s19, %s20
      %p24 = pneg %p18
      %p25 = scmp.eq.s32.totalorder %s9, 3
      %p26 = por %p24, %p25
      %p27 = scmp.ne.s32.totalorder %s19, %s22
      %p28 = scmp.eq.s32.totalorder %s9, 0
      %p29 = por %p27, %p28
      %p30 = scmp.ne.s32.totalorder %s19, %s22
      %p31 = scmp.eq.s32.totalorder %s14, 3
      %p32 = por %p30, %p31
      %p33 = scmp.ne.s32.totalorder %s22, %s23
      %p34 = scmp.eq.s32.totalorder %s14, 0
      %p35 = por %p33, %p34
      %p36 = scmp.ne.s32.totalorder %s22, %s23
      %p37 = scmp.eq.s32.totalorder %s15, 3
      %p38 = por %p36, %p37
      %p40 = scmp.ne.s32.totalorder %s23, %s39
      %p41 = scmp.eq.s32.totalorder %s15, 0
      %p42 = por %p40, %p41
      %s43 = ssub.s32 %s9, %s16
      %p44 = scmp.eq.s32.totalorder %s43, 0
      %s46 = sadd.s32 %s45, 1
      %s47 = scalar_select %p44, %s45, %s46
      %p50 = pneg %p44
      %p51 = scmp.eq.s32.totalorder %s9, 3
      %p52 = por %p50, %p51
      %p53 = scmp.ne.s32.totalorder %s45, %s48
      %p54 = scmp.eq.s32.totalorder %s9, 0
      %p55 = por %p53, %p54
      %p56 = scmp.ne.s32.totalorder %s45, %s48
      %p57 = scmp.eq.s32.totalorder %s14, 3
      %p58 = por %p56, %p57
      %p59 = scmp.ne.s32.totalorder %s48, %s49
      %p60 = scmp.eq.s32.totalorder %s14, 0
      %p61 = por %p59, %p60
      %p62 = scmp.ne.s32.totalorder %s48, %s49
      %p63 = scmp.eq.s32.totalorder %s15, 3
      %p64 = por %p62, %p63
      %p66 = scmp.ne.s32.totalorder %s49, %s65
      %p67 = scmp.eq.s32.totalorder %s15, 0
      %p68 = por %p66, %p67
      %s69 = ssub.s32 %s9, %s16
      %p70 = scmp.eq.s32.totalorder %s69, 0
      %s72 = sadd.s32 %s71, 1
      %s73 = scalar_select %p70, %s71, %s72
      %p76 = pneg %p70
      %p77 = scmp.eq.s32.totalorder %s9, 3
      %p78 = por %p76, %p77
      %p79 = scmp.ne.s32.totalorder %s71, %s74
      %p80 = scmp.eq.s32.totalorder %s9, 0
      %p81 = por %p79, %p80
      %p82 = scmp.ne.s32.totalorder %s71, %s74
      %p83 = scmp.eq.s32.totalorder %s14, 3
      %p84 = por %p82, %p83
      %p85 = scmp.ne.s32.totalorder %s74, %s75
      %p86 = scmp.eq.s32.totalorder %s14, 0
      %p87 = por %p85, %p86
      %p88 = scmp.ne.s32.totalorder %s74, %s75
      %p89 = scmp.eq.s32.totalorder %s15, 3
      %p90 = por %p88, %p89
      %p92 = scmp.ne.s32.totalorder %s75, %s91
      %p93 = scmp.eq.s32.totalorder %s15, 0
      %p94 = por %p92, %p93
      %s95 = ssub.s32 %s9, %s16
      %p96 = scmp.eq.s32.totalorder %s95, 0
      %s98 = sadd.s32 %s97, 1
      %s99 = scalar_select %p96, %s97, %s98
      %p102 = pneg %p96
      %p103 = scmp.eq.s32.totalorder %s9, 3
      %p104 = por %p102, %p103
      %p105 = scmp.ne.s32.totalorder %s97, %s100
      %p106 = scmp.eq.s32.totalorder %s9, 0
      %p107 = por %p105, %p106
      %p108 = scmp.ne.s32.totalorder %s97, %s100
      %p109 = scmp.eq.s32.totalorder %s14, 3
      %p110 = por %p108, %p109
      %p111 = scmp.ne.s32.totalorder %s100, %s101
      %p112 = scmp.eq.s32.totalorder %s14, 0
      %p113 = por %p111, %p112
      %p114 = scmp.ne.s32.totalorder %s100, %s101
      %p115 = scmp.eq.s32.totalorder %s15, 3
      %p116 = por %p114, %p115
      %p118 = scmp.ne.s32.totalorder %s101, %s117
      %p119 = scmp.eq.s32.totalorder %s15, 0
      %p120 = por %p118, %p119
      %p121 = scmp.le.s32.totalorder 1, %s9
      %p122 = scmp.lt.s32.totalorder %s9, 5
      %p123 = pnand %p121, %p122
      %p124 = pneg %p123
      // Predicated region
      $region9: #{bn_add_relu.1} parent=5 // pred_check
        _
      $region10: #{bn_add_relu.1} parent=5 // pred_check_branch
        %126 = sbr.rel (%p123) target = $region12
      $region11: #{bn_add_relu.1} parent=5 // pred_region
        %s127 = ssub.s32 %s9, 1
      $region12: #{bn_add_relu.1} parent=5 // pred_fallthru
        _
      %p128 = scmp.lt.s32.totalorder %s9, 4
      // Predicated region
      $region13: #{bn_add_relu.1} parent=5 // pred_check
        %p129 = pneg %p128
      $region14: #{bn_add_relu.1} parent=5 // pred_check_branch
        %131 = sbr.rel (%p129) target = $region16
      $region15: #{bn_add_relu.1} parent=5 // pred_region
        // Predicated region
        $region17: #{bn_add_relu.1} parent=15 // pred_check
          %p132 = pneg %p29
        $region18: #{bn_add_relu.1} parent=15 // pred_check_branch
          %134 = sbr.rel (%p132) target = $region20
        $region19: #{bn_add_relu.1} parent=15 // pred_region
          %s135 = smul.u32 22, %s9
          %s136 = ssub.s32 87, %s135
          %p137 = scmp.lt.s32.totalorder %s136, 22
          %s138 = scalar_select %p137, %s136, 22
          %s139 = smul.u32 128, %s138
          %s140 = smul.u32 %s139, 7
          %p141 = scmp.lt.s32.totalorder %s135, 86
          %s142 = scalar_select %p141, %s135, 86
          %s143 = smul.addr %s142, 7
          %s144 = smul.addr %s143, 8
          %s145 = scalar_lea.vmem %s0, %s144
          %s146 = smul.u32 22, %s9
          %s147 = ssub.s32 87, %s146
          %p148 = scmp.lt.s32.totalorder %s147, 22
          %s149 = scalar_select %p148, %s147, 22
          %s150 = smul.u32 128, %s149
          %s151 = smul.u32 %s150, 7
        $region20: #{bn_add_relu.1} parent=15 // pred_fallthru
          _
        // Predicated region
        $region21: #{bn_add_relu.1} parent=15 // pred_check
          %p152 = pneg %p55
        $region22: #{bn_add_relu.1} parent=15 // pred_check_branch
          %154 = sbr.rel (%p152) target = $region24
        $region23: #{bn_add_relu.1} parent=15 // pred_region
          %s155 = smul.u32 22, %s9
          %s156 = ssub.s32 87, %s155
          %p157 = scmp.lt.s32.totalorder %s156, 22
          %s158 = scalar_select %p157, %s156, 22
          %s159 = smul.u32 128, %s158
          %s160 = smul.u32 %s159, 7
          %p161 = scmp.lt.s32.totalorder %s155, 86
          %s162 = scalar_select %p161, %s155, 86
          %s163 = smul.addr %s162, 7
          %s164 = smul.addr %s163, 8
          %s165 = scalar_lea.vmem %s1, %s164
          %s166 = smul.u32 22, %s9
          %s167 = ssub.s32 87, %s166
          %p168 = scmp.lt.s32.totalorder %s167, 22
          %s169 = scalar_select %p168, %s167, 22
          %s170 = smul.u32 128, %s169
          %s171 = smul.u32 %s170, 7
        $region24: #{bn_add_relu.1} parent=15 // pred_fallthru
          _
        // Predicated region
        $region25: #{bn_add_relu.1} parent=15 // pred_check
          %p172 = pneg %p81
        $region26: #{bn_add_relu.1} parent=15 // pred_check_branch
          %174 = sbr.rel (%p172) target = $region28
        $region27: #{bn_add_relu.1} parent=15 // pred_region
          %s175 = smul.u32 22, %s9
          %s176 = ssub.s32 87, %s175
          %p177 = scmp.lt.s32.totalorder %s176, 22
          %s178 = scalar_select %p177, %s176, 22
          %s179 = smul.u32 128, %s178
          %p180 = scmp.lt.s32.totalorder %s175, 86
          %s181 = scalar_select %p180, %s175, 86
          %s182 = smul.addr %s181, 8
          %s183 = scalar_lea.vmem %s2, %s182
          %s184 = smul.u32 22, %s9
          %s185 = ssub.s32 87, %s184
          %p186 = scmp.lt.s32.totalorder %s185, 22
          %s187 = scalar_select %p186, %s185, 22
          %s188 = smul.u32 128, %s187
        $region28: #{bn_add_relu.1} parent=15 // pred_fallthru
          _
      $region16: #{bn_add_relu.1} parent=5 // pred_fallthru
        _
      %p189 = scmp.le.s32.totalorder 1, %s9
      %p190 = scmp.lt.s32.totalorder %s9, 5
      %p191 = pnand %p189, %p190
      %p192 = pneg %p191
      // Predicated region
      $region29: #{bn_add_relu.1} parent=5 // pred_check
        _
      $region30: #{bn_add_relu.1} parent=5 // pred_check_branch
        %194 = sbr.rel (%p191) target = $region32
      $region31: #{bn_add_relu.1} parent=5 // pred_region
        %s195 = ssub.s32 %s9, 1
        %s196 = smul.u32 22, %s14
        %s197 = ssub.s32 87, %s196
        %p198 = scmp.lt.s32.totalorder %s197, 22
        %s199 = scalar_select %p198, %s197, 22
        %s200 = smul.u32 128, %s199
        %s201 = smul.u32 %s200, 7
        %p202 = scmp.lt.s32.totalorder %s196, 86
        %s203 = scalar_select %p202, %s196, 86
        %s204 = smul.addr %s203, 7
        %s205 = smul.addr %s204, 8
        %s206 = scalar_lea.vmem %s0, %s205
        %p207 = pneg %p35
        %p208 = pneg %p32
        %s209 = smul.u32 22, %s14
        %s210 = ssub.s32 87, %s209
        %p211 = scmp.lt.s32.totalorder %s210, 22
        %s212 = scalar_select %p211, %s210, 22
        %s213 = smul.u32 128, %s212
        %s214 = smul.u32 %s213, 7
        %p215 = scmp.lt.s32.totalorder %s209, 86
        %s216 = scalar_select %p215, %s209, 86
        %s217 = smul.addr %s216, 7
        %s218 = smul.addr %s217, 8
        %s219 = scalar_lea.vmem %s1, %s218
        %p220 = pneg %p61
        %p221 = pneg %p58
        %s222 = smul.u32 22, %s14
        %s223 = ssub.s32 87, %s222
        %p224 = scmp.lt.s32.totalorder %s223, 22
        %s225 = scalar_select %p224, %s223, 22
        %s226 = smul.u32 128, %s225
        %p227 = scmp.lt.s32.totalorder %s222, 86
        %s228 = scalar_select %p227, %s222, 86
        %s229 = smul.addr %s228, 8
        %s230 = scalar_lea.vmem %s2, %s229
        %p231 = pneg %p87
        %p232 = pneg %p84
        %p233 = pneg %p113
        %p234 = pneg %p110
        %s235 = sand.u32 %s100, 1
        %s236 = sand.u32 %s100, 1
        %s237 = smul.addr %s236, 1232
        %s238 = scalar_lea.vmem [#allocation2], %s237
        %s239 = smul.u32 22, %s14
        %s240 = ssub.s32 87, %s239
        %p241 = scmp.lt.s32.totalorder %s240, 22
        %s242 = scalar_select %p241, %s240, 22
        %s243 = smul.u32 128, %s242
        %s244 = smul.u32 %s243, 7
        %p245 = scmp.lt.s32.totalorder %s239, 86
        %s246 = scalar_select %p245, %s239, 86
        %s247 = smul.addr %s246, 7
        %s248 = smul.addr %s247, 8
        %s249 = scalar_lea.vmem %s0, %s248
        %s250 = smul.u32 22, %s14
        %s251 = ssub.s32 87, %s250
        %p252 = scmp.lt.s32.totalorder %s251, 22
        %s253 = scalar_select %p252, %s251, 22
        %s254 = smul.u32 128, %s253
        %s255 = smul.u32 %s254, 7
        %s256 = smul.u32 22, %s14
        %s257 = ssub.s32 87, %s256
        %p258 = scmp.lt.s32.totalorder %s257, 22
        %s259 = scalar_select %p258, %s257, 22
        %s260 = smul.u32 128, %s259
        %s261 = smul.u32 %s260, 7
        %p262 = scmp.lt.s32.totalorder %s256, 86
        %s263 = scalar_select %p262, %s256, 86
        %s264 = smul.addr %s263, 7
        %s265 = smul.addr %s264, 8
        %s266 = scalar_lea.vmem %s1, %s265
        %s267 = smul.u32 22, %s14
        %s268 = ssub.s32 87, %s267
        %p269 = scmp.lt.s32.totalorder %s268, 22
        %s270 = scalar_select %p269, %s268, 22
        %s271 = smul.u32 128, %s270
        %s272 = smul.u32 %s271, 7
        %s273 = smul.u32 22, %s14
        %s274 = ssub.s32 87, %s273
        %p275 = scmp.lt.s32.totalorder %s274, 22
        %s276 = scalar_select %p275, %s274, 22
        %s277 = smul.u32 128, %s276
        %p278 = scmp.lt.s32.totalorder %s273, 86
        %s279 = scalar_select %p278, %s273, 86
        %s280 = smul.addr %s279, 8
        %s281 = scalar_lea.vmem %s2, %s280
        %s282 = smul.u32 22, %s14
        %s283 = ssub.s32 87, %s282
        %p284 = scmp.lt.s32.totalorder %s283, 22
        %s285 = scalar_select %p284, %s283, 22
        %s286 = smul.u32 128, %s285
        %s287 = smul.u32 22, %s14
        %s288 = ssub.s32 87, %s287
        %p289 = scmp.lt.s32.totalorder %s288, 22
        %s290 = scalar_select %p289, %s288, 22
        %s291 = smul.u32 128, %s290
        %s292 = smul.u32 %s291, 7
        %v293 = vld [vmem:[%s249] sm:$0xff]
        %v294 = vld [vmem:[%s249 + $0x8] sm:$0xff]
        %v295 = vld [vmem:[%s249 + $0x10] sm:$0xff]
        %v296 = vld [vmem:[%s249 + $0x18] sm:$0xff]
        %v297 = vld [vmem:[%s249 + $0x20] sm:$0xff]
        %v298 = vld [vmem:[%s249 + $0x28] sm:$0xff]
        %v299 = vld [vmem:[%s249 + $0x30] sm:$0xff]
        %v300 = vld [vmem:[%s249 + $0x38] sm:$0xff]
        %v301 = vld [vmem:[%s249 + $0x40] sm:$0xff]
        %v302 = vld [vmem:[%s249 + $0x48] sm:$0xff]
        %v303 = vld [vmem:[%s249 + $0x50] sm:$0xff]
        %v304 = vld [vmem:[%s249 + $0x58] sm:$0xff]
        %v305 = vld [vmem:[%s249 + $0x60] sm:$0xff]
        %v306 = vld [vmem:[%s249 + $0x68] sm:$0xff]
        %v307 = vld [vmem:[%s249 + $0x70] sm:$0xff]
        %v308 = vld [vmem:[%s249 + $0x78] sm:$0xff]
        %v309 = vld [vmem:[%s249 + $0x80] sm:$0xff]
        %v310 = vld [vmem:[%s249 + $0x88] sm:$0xff]
        %v311 = vld [vmem:[%s249 + $0x90] sm:$0xff]
        %v312 = vld [vmem:[%s249 + $0x98] sm:$0xff]
        %v313 = vld [vmem:[%s249 + $0xa0] sm:$0xff]
        %v314 = vld [vmem:[%s249 + $0xa8] sm:$0xff]
        %v315 = vld [vmem:[%s249 + $0xb0] sm:$0xff]
        %v316 = vld [vmem:[%s249 + $0xb8] sm:$0xff]
        %v317 = vld [vmem:[%s249 + $0xc0] sm:$0xff]
        %v318 = vld [vmem:[%s249 + $0xc8] sm:$0xff]
        %v319 = vld [vmem:[%s249 + $0xd0] sm:$0xff]
        %v320 = vld [vmem:[%s249 + $0xd8] sm:$0xff]
        %v321 = vld [vmem:[%s249 + $0xe0] sm:$0xff]
        %v322 = vld [vmem:[%s249 + $0xe8] sm:$0xff]
        %v323 = vld [vmem:[%s249 + $0xf0] sm:$0xff]
        %v324 = vld [vmem:[%s249 + $0xf8] sm:$0xff]
        %v325 = vld [vmem:[%s249 + $0x100] sm:$0xff]
        %v326 = vld [vmem:[%s249 + $0x108] sm:$0xff]
        %v327 = vld [vmem:[%s249 + $0x110] sm:$0xff]
        %v328 = vld [vmem:[%s249 + $0x118] sm:$0xff]
        %v329 = vld [vmem:[%s249 + $0x120] sm:$0xff]
        %v330 = vld [vmem:[%s249 + $0x128] sm:$0xff]
        %v331 = vld [vmem:[%s249 + $0x130] sm:$0xff]
        %v332 = vld [vmem:[%s249 + $0x138] sm:$0xff]
        %v333 = vld [vmem:[%s249 + $0x140] sm:$0xff]
        %v334 = vld [vmem:[%s249 + $0x148] sm:$0xff]
        %v335 = vld [vmem:[%s249 + $0x150] sm:$0xff]
        %v336 = vld [vmem:[%s249 + $0x158] sm:$0xff]
        %v337 = vld [vmem:[%s249 + $0x160] sm:$0xff]
        %v338 = vld [vmem:[%s249 + $0x168] sm:$0xff]
        %v339 = vld [vmem:[%s249 + $0x170] sm:$0xff]
        %v340 = vld [vmem:[%s249 + $0x178] sm:$0xff]
        %v341 = vld [vmem:[%s249 + $0x180] sm:$0xff]
        %v342 = vld [vmem:[%s249 + $0x188] sm:$0xff]
        %v343 = vld [vmem:[%s249 + $0x190] sm:$0xff]
        %v344 = vld [vmem:[%s249 + $0x198] sm:$0xff]
        %v345 = vld [vmem:[%s249 + $0x1a0] sm:$0xff]
        %v346 = vld [vmem:[%s249 + $0x1a8] sm:$0xff]
        %v347 = vld [vmem:[%s249 + $0x1b0] sm:$0xff]
        %v348 = vld [vmem:[%s249 + $0x1b8] sm:$0xff]
        %v349 = vld [vmem:[%s249 + $0x1c0] sm:$0xff]
        %v350 = vld [vmem:[%s249 + $0x1c8] sm:$0xff]
        %v351 = vld [vmem:[%s249 + $0x1d0] sm:$0xff]
        %v352 = vld [vmem:[%s249 + $0x1d8] sm:$0xff]
        %v353 = vld [vmem:[%s249 + $0x1e0] sm:$0xff]
        %v354 = vld [vmem:[%s249 + $0x1e8] sm:$0xff]
        %v355 = vld [vmem:[%s249 + $0x1f0] sm:$0xff]
        %v356 = vld [vmem:[%s249 + $0x1f8] sm:$0xff]
        %v357 = vld [vmem:[%s249 + $0x200] sm:$0xff]
        %v358 = vld [vmem:[%s249 + $0x208] sm:$0xff]
        %v359 = vld [vmem:[%s249 + $0x210] sm:$0xff]
        %v360 = vld [vmem:[%s249 + $0x218] sm:$0xff]
        %v361 = vld [vmem:[%s249 + $0x220] sm:$0xff]
        %v362 = vld [vmem:[%s249 + $0x228] sm:$0xff]
        %v363 = vld [vmem:[%s249 + $0x230] sm:$0xff]
        %v364 = vld [vmem:[%s249 + $0x238] sm:$0xff]
        %v365 = vld [vmem:[%s249 + $0x240] sm:$0xff]
        %v366 = vld [vmem:[%s249 + $0x248] sm:$0xff]
        %v367 = vld [vmem:[%s249 + $0x250] sm:$0xff]
        %v368 = vld [vmem:[%s249 + $0x258] sm:$0xff]
        %v369 = vld [vmem:[%s249 + $0x260] sm:$0xff]
        %v370 = vld [vmem:[%s249 + $0x268] sm:$0xff]
        %v371 = vld [vmem:[%s249 + $0x270] sm:$0xff]
        %v372 = vld [vmem:[%s249 + $0x278] sm:$0xff]
        %v373 = vld [vmem:[%s249 + $0x280] sm:$0xff]
        %v374 = vld [vmem:[%s249 + $0x288] sm:$0xff]
        %v375 = vld [vmem:[%s249 + $0x290] sm:$0xff]
        %v376 = vld [vmem:[%s249 + $0x298] sm:$0xff]
        %v377 = vld [vmem:[%s249 + $0x2a0] sm:$0xff]
        %v378 = vld [vmem:[%s249 + $0x2a8] sm:$0xff]
        %v379 = vld [vmem:[%s249 + $0x2b0] sm:$0xff]
        %v380 = vld [vmem:[%s249 + $0x2b8] sm:$0xff]
        %v381 = vld [vmem:[%s249 + $0x2c0] sm:$0xff]
        %v382 = vld [vmem:[%s249 + $0x2c8] sm:$0xff]
        %v383 = vld [vmem:[%s249 + $0x2d0] sm:$0xff]
        %v384 = vld [vmem:[%s249 + $0x2d8] sm:$0xff]
        %v385 = vld [vmem:[%s249 + $0x2e0] sm:$0xff]
        %v386 = vld [vmem:[%s249 + $0x2e8] sm:$0xff]
        %v387 = vld [vmem:[%s249 + $0x2f0] sm:$0xff]
        %v388 = vld [vmem:[%s249 + $0x2f8] sm:$0xff]
        %v389 = vld [vmem:[%s249 + $0x300] sm:$0xff]
        %v390 = vld [vmem:[%s249 + $0x308] sm:$0xff]
        %v391 = vld [vmem:[%s249 + $0x310] sm:$0xff]
        %v392 = vld [vmem:[%s249 + $0x318] sm:$0xff]
        %v393 = vld [vmem:[%s249 + $0x320] sm:$0xff]
        %v394 = vld [vmem:[%s249 + $0x328] sm:$0xff]
        %v395 = vld [vmem:[%s249 + $0x330] sm:$0xff]
        %v396 = vld [vmem:[%s249 + $0x338] sm:$0xff]
        %v397 = vld [vmem:[%s249 + $0x340] sm:$0xff]
        %v398 = vld [vmem:[%s249 + $0x348] sm:$0xff]
        %v399 = vld [vmem:[%s249 + $0x350] sm:$0xff]
        %v400 = vld [vmem:[%s249 + $0x358] sm:$0xff]
        %v401 = vld [vmem:[%s249 + $0x360] sm:$0xff]
        %v402 = vld [vmem:[%s249 + $0x368] sm:$0xff]
        %v403 = vld [vmem:[%s249 + $0x370] sm:$0xff]
        %v404 = vld [vmem:[%s249 + $0x378] sm:$0xff]
        %v405 = vld [vmem:[%s249 + $0x380] sm:$0xff]
        %v406 = vld [vmem:[%s249 + $0x388] sm:$0xff]
        %v407 = vld [vmem:[%s249 + $0x390] sm:$0xff]
        %v408 = vld [vmem:[%s249 + $0x398] sm:$0xff]
        %v409 = vld [vmem:[%s249 + $0x3a0] sm:$0xff]
        %v410 = vld [vmem:[%s249 + $0x3a8] sm:$0xff]
        %v411 = vld [vmem:[%s249 + $0x3b0] sm:$0xff]
        %v412 = vld [vmem:[%s249 + $0x3b8] sm:$0xff]
        %v413 = vld [vmem:[%s249 + $0x3c0] sm:$0xff]
        %v414 = vld [vmem:[%s249 + $0x3c8] sm:$0xff]
        %v415 = vld [vmem:[%s249 + $0x3d0] sm:$0xff]
        %v416 = vld [vmem:[%s249 + $0x3d8] sm:$0xff]
        %v417 = vld [vmem:[%s249 + $0x3e0] sm:$0xff]
        %v418 = vld [vmem:[%s249 + $0x3e8] sm:$0xff]
        %v419 = vld [vmem:[%s249 + $0x3f0] sm:$0xff]
        %v420 = vld [vmem:[%s249 + $0x3f8] sm:$0xff]
        %v421 = vld [vmem:[%s249 + $0x400] sm:$0xff]
        %v422 = vld [vmem:[%s249 + $0x408] sm:$0xff]
        %v423 = vld [vmem:[%s249 + $0x410] sm:$0xff]
        %v424 = vld [vmem:[%s249 + $0x418] sm:$0xff]
        %v425 = vld [vmem:[%s249 + $0x420] sm:$0xff]
        %v426 = vld [vmem:[%s249 + $0x428] sm:$0xff]
        %v427 = vld [vmem:[%s249 + $0x430] sm:$0xff]
        %v428 = vld [vmem:[%s249 + $0x438] sm:$0xff]
        %v429 = vld [vmem:[%s249 + $0x440] sm:$0xff]
        %v430 = vld [vmem:[%s249 + $0x448] sm:$0xff]
        %v431 = vld [vmem:[%s249 + $0x450] sm:$0xff]
        %v432 = vld [vmem:[%s249 + $0x458] sm:$0xff]
        %v433 = vld [vmem:[%s249 + $0x460] sm:$0xff]
        %v434 = vld [vmem:[%s249 + $0x468] sm:$0xff]
        %v435 = vld [vmem:[%s249 + $0x470] sm:$0xff]
        %v436 = vld [vmem:[%s249 + $0x478] sm:$0xff]
        %v437 = vld [vmem:[%s249 + $0x480] sm:$0xff]
        %v438 = vld [vmem:[%s249 + $0x488] sm:$0xff]
        %v439 = vld [vmem:[%s249 + $0x490] sm:$0xff]
        %v440 = vld [vmem:[%s249 + $0x498] sm:$0xff]
        %v441 = vld [vmem:[%s249 + $0x4a0] sm:$0xff]
        %v442 = vld [vmem:[%s249 + $0x4a8] sm:$0xff]
        %v443 = vld [vmem:[%s249 + $0x4b0] sm:$0xff]
        %v444 = vld [vmem:[%s249 + $0x4b8] sm:$0xff]
        %v445 = vld [vmem:[%s249 + $0x4c0] sm:$0xff]
        %v446 = vld [vmem:[%s249 + $0x4c8] sm:$0xff]
        %v447 = vld [vmem:[%s266] sm:$0xff]
        %v448 = vld [vmem:[%s266 + $0x8] sm:$0xff]
        %v449 = vld [vmem:[%s266 + $0x10] sm:$0xff]
        %v450 = vld [vmem:[%s266 + $0x18] sm:$0xff]
        %v451 = vld [vmem:[%s266 + $0x20] sm:$0xff]
        %v452 = vld [vmem:[%s266 + $0x28] sm:$0xff]
        %v453 = vld [vmem:[%s266 + $0x30] sm:$0xff]
        %v454 = vld [vmem:[%s266 + $0x38] sm:$0xff]
        %v455 = vld [vmem:[%s266 + $0x40] sm:$0xff]
        %v456 = vld [vmem:[%s266 + $0x48] sm:$0xff]
        %v457 = vld [vmem:[%s266 + $0x50] sm:$0xff]
        %v458 = vld [vmem:[%s266 + $0x58] sm:$0xff]
        %v459 = vld [vmem:[%s266 + $0x60] sm:$0xff]
        %v460 = vld [vmem:[%s266 + $0x68] sm:$0xff]
        %v461 = vld [vmem:[%s266 + $0x70] sm:$0xff]
        %v462 = vld [vmem:[%s266 + $0x78] sm:$0xff]
        %v463 = vld [vmem:[%s266 + $0x80] sm:$0xff]
        %v464 = vld [vmem:[%s266 + $0x88] sm:$0xff]
        %v465 = vld [vmem:[%s266 + $0x90] sm:$0xff]
        %v466 = vld [vmem:[%s266 + $0x98] sm:$0xff]
        %v467 = vld [vmem:[%s266 + $0xa0] sm:$0xff]
        %v468 = vld [vmem:[%s266 + $0xa8] sm:$0xff]
        %v469 = vld [vmem:[%s266 + $0xb0] sm:$0xff]
        %v470 = vld [vmem:[%s266 + $0xb8] sm:$0xff]
        %v471 = vld [vmem:[%s266 + $0xc0] sm:$0xff]
        %v472 = vld [vmem:[%s266 + $0xc8] sm:$0xff]
        %v473 = vld [vmem:[%s266 + $0xd0] sm:$0xff]
        %v474 = vld [vmem:[%s266 + $0xd8] sm:$0xff]
        %v475 = vld [vmem:[%s266 + $0xe0] sm:$0xff]
        %v476 = vld [vmem:[%s266 + $0xe8] sm:$0xff]
        %v477 = vld [vmem:[%s266 + $0xf0] sm:$0xff]
        %v478 = vld [vmem:[%s266 + $0xf8] sm:$0xff]
        %v479 = vld [vmem:[%s266 + $0x100] sm:$0xff]
        %v480 = vld [vmem:[%s266 + $0x108] sm:$0xff]
        %v481 = vld [vmem:[%s266 + $0x110] sm:$0xff]
        %v482 = vld [vmem:[%s266 + $0x118] sm:$0xff]
        %v483 = vld [vmem:[%s266 + $0x120] sm:$0xff]
        %v484 = vld [vmem:[%s266 + $0x128] sm:$0xff]
        %v485 = vld [vmem:[%s266 + $0x130] sm:$0xff]
        %v486 = vld [vmem:[%s266 + $0x138] sm:$0xff]
        %v487 = vld [vmem:[%s266 + $0x140] sm:$0xff]
        %v488 = vld [vmem:[%s266 + $0x148] sm:$0xff]
        %v489 = vld [vmem:[%s266 + $0x150] sm:$0xff]
        %v490 = vld [vmem:[%s266 + $0x158] sm:$0xff]
        %v491 = vld [vmem:[%s266 + $0x160] sm:$0xff]
        %v492 = vld [vmem:[%s266 + $0x168] sm:$0xff]
        %v493 = vld [vmem:[%s266 + $0x170] sm:$0xff]
        %v494 = vld [vmem:[%s266 + $0x178] sm:$0xff]
        %v495 = vld [vmem:[%s266 + $0x180] sm:$0xff]
        %v496 = vld [vmem:[%s266 + $0x188] sm:$0xff]
        %v497 = vld [vmem:[%s266 + $0x190] sm:$0xff]
        %v498 = vld [vmem:[%s266 + $0x198] sm:$0xff]
        %v499 = vld [vmem:[%s266 + $0x1a0] sm:$0xff]
        %v500 = vld [vmem:[%s266 + $0x1a8] sm:$0xff]
        %v501 = vld [vmem:[%s266 + $0x1b0] sm:$0xff]
        %v502 = vld [vmem:[%s266 + $0x1b8] sm:$0xff]
        %v503 = vld [vmem:[%s266 + $0x1c0] sm:$0xff]
        %v504 = vld [vmem:[%s266 + $0x1c8] sm:$0xff]
        %v505 = vld [vmem:[%s266 + $0x1d0] sm:$0xff]
        %v506 = vld [vmem:[%s266 + $0x1d8] sm:$0xff]
        %v507 = vld [vmem:[%s266 + $0x1e0] sm:$0xff]
        %v508 = vld [vmem:[%s266 + $0x1e8] sm:$0xff]
        %v509 = vld [vmem:[%s266 + $0x1f0] sm:$0xff]
        %v510 = vld [vmem:[%s266 + $0x1f8] sm:$0xff]
        %v511 = vld [vmem:[%s266 + $0x200] sm:$0xff]
        %v512 = vld [vmem:[%s266 + $0x208] sm:$0xff]
        %v513 = vld [vmem:[%s266 + $0x210] sm:$0xff]
        %v514 = vld [vmem:[%s266 + $0x218] sm:$0xff]
        %v515 = vld [vmem:[%s266 + $0x220] sm:$0xff]
        %v516 = vld [vmem:[%s266 + $0x228] sm:$0xff]
        %v517 = vld [vmem:[%s266 + $0x230] sm:$0xff]
        %v518 = vld [vmem:[%s266 + $0x238] sm:$0xff]
        %v519 = vld [vmem:[%s266 + $0x240] sm:$0xff]
        %v520 = vld [vmem:[%s266 + $0x248] sm:$0xff]
        %v521 = vld [vmem:[%s266 + $0x250] sm:$0xff]
        %v522 = vld [vmem:[%s266 + $0x258] sm:$0xff]
        %v523 = vld [vmem:[%s266 + $0x260] sm:$0xff]
        %v524 = vld [vmem:[%s266 + $0x268] sm:$0xff]
        %v525 = vld [vmem:[%s266 + $0x270] sm:$0xff]
        %v526 = vld [vmem:[%s266 + $0x278] sm:$0xff]
        %v527 = vld [vmem:[%s266 + $0x280] sm:$0xff]
        %v528 = vld [vmem:[%s266 + $0x288] sm:$0xff]
        %v529 = vld [vmem:[%s266 + $0x290] sm:$0xff]
        %v530 = vld [vmem:[%s266 + $0x298] sm:$0xff]
        %v531 = vld [vmem:[%s266 + $0x2a0] sm:$0xff]
        %v532 = vld [vmem:[%s266 + $0x2a8] sm:$0xff]
        %v533 = vld [vmem:[%s266 + $0x2b0] sm:$0xff]
        %v534 = vld [vmem:[%s266 + $0x2b8] sm:$0xff]
        %v535 = vld [vmem:[%s266 + $0x2c0] sm:$0xff]
        %v536 = vld [vmem:[%s266 + $0x2c8] sm:$0xff]
        %v537 = vld [vmem:[%s266 + $0x2d0] sm:$0xff]
        %v538 = vld [vmem:[%s266 + $0x2d8] sm:$0xff]
        %v539 = vld [vmem:[%s266 + $0x2e0] sm:$0xff]
        %v540 = vld [vmem:[%s266 + $0x2e8] sm:$0xff]
        %v541 = vld [vmem:[%s266 + $0x2f0] sm:$0xff]
        %v542 = vld [vmem:[%s266 + $0x2f8] sm:$0xff]
        %v543 = vld [vmem:[%s266 + $0x300] sm:$0xff]
        %v544 = vld [vmem:[%s266 + $0x308] sm:$0xff]
        %v545 = vld [vmem:[%s266 + $0x310] sm:$0xff]
        %v546 = vld [vmem:[%s266 + $0x318] sm:$0xff]
        %v547 = vld [vmem:[%s266 + $0x320] sm:$0xff]
        %v548 = vld [vmem:[%s266 + $0x328] sm:$0xff]
        %v549 = vld [vmem:[%s266 + $0x330] sm:$0xff]
        %v550 = vld [vmem:[%s266 + $0x338] sm:$0xff]
        %v551 = vld [vmem:[%s266 + $0x340] sm:$0xff]
        %v552 = vld [vmem:[%s266 + $0x348] sm:$0xff]
        %v553 = vld [vmem:[%s266 + $0x350] sm:$0xff]
        %v554 = vld [vmem:[%s266 + $0x358] sm:$0xff]
        %v555 = vld [vmem:[%s266 + $0x360] sm:$0xff]
        %v556 = vld [vmem:[%s266 + $0x368] sm:$0xff]
        %v557 = vld [vmem:[%s266 + $0x370] sm:$0xff]
        %v558 = vld [vmem:[%s266 + $0x378] sm:$0xff]
        %v559 = vld [vmem:[%s266 + $0x380] sm:$0xff]
        %v560 = vld [vmem:[%s266 + $0x388] sm:$0xff]
        %v561 = vld [vmem:[%s266 + $0x390] sm:$0xff]
        %v562 = vld [vmem:[%s266 + $0x398] sm:$0xff]
        %v563 = vld [vmem:[%s266 + $0x3a0] sm:$0xff]
        %v564 = vld [vmem:[%s266 + $0x3a8] sm:$0xff]
        %v565 = vld [vmem:[%s266 + $0x3b0] sm:$0xff]
        %v566 = vld [vmem:[%s266 + $0x3b8] sm:$0xff]
        %v567 = vld [vmem:[%s266 + $0x3c0] sm:$0xff]
        %v568 = vld [vmem:[%s266 + $0x3c8] sm:$0xff]
        %v569 = vld [vmem:[%s266 + $0x3d0] sm:$0xff]
        %v570 = vld [vmem:[%s266 + $0x3d8] sm:$0xff]
        %v571 = vld [vmem:[%s266 + $0x3e0] sm:$0xff]
        %v572 = vld [vmem:[%s266 + $0x3e8] sm:$0xff]
        %v573 = vld [vmem:[%s266 + $0x3f0] sm:$0xff]
        %v574 = vld [vmem:[%s266 + $0x3f8] sm:$0xff]
        %v575 = vld [vmem:[%s266 + $0x400] sm:$0xff]
        %v576 = vld [vmem:[%s266 + $0x408] sm:$0xff]
        %v577 = vld [vmem:[%s266 + $0x410] sm:$0xff]
        %v578 = vld [vmem:[%s266 + $0x418] sm:$0xff]
        %v579 = vld [vmem:[%s266 + $0x420] sm:$0xff]
        %v580 = vld [vmem:[%s266 + $0x428] sm:$0xff]
        %v581 = vld [vmem:[%s266 + $0x430] sm:$0xff]
        %v582 = vld [vmem:[%s266 + $0x438] sm:$0xff]
        %v583 = vld [vmem:[%s266 + $0x440] sm:$0xff]
        %v584 = vld [vmem:[%s266 + $0x448] sm:$0xff]
        %v585 = vld [vmem:[%s266 + $0x450] sm:$0xff]
        %v586 = vld [vmem:[%s266 + $0x458] sm:$0xff]
        %v587 = vld [vmem:[%s266 + $0x460] sm:$0xff]
        %v588 = vld [vmem:[%s266 + $0x468] sm:$0xff]
        %v589 = vld [vmem:[%s266 + $0x470] sm:$0xff]
        %v590 = vld [vmem:[%s266 + $0x478] sm:$0xff]
        %v591 = vld [vmem:[%s266 + $0x480] sm:$0xff]
        %v592 = vld [vmem:[%s266 + $0x488] sm:$0xff]
        %v593 = vld [vmem:[%s266 + $0x490] sm:$0xff]
        %v594 = vld [vmem:[%s266 + $0x498] sm:$0xff]
        %v595 = vld [vmem:[%s266 + $0x4a0] sm:$0xff]
        %v596 = vld [vmem:[%s266 + $0x4a8] sm:$0xff]
        %v597 = vld [vmem:[%s266 + $0x4b0] sm:$0xff]
        %v598 = vld [vmem:[%s266 + $0x4b8] sm:$0xff]
        %v599 = vld [vmem:[%s266 + $0x4c0] sm:$0xff]
        %v600 = vld [vmem:[%s266 + $0x4c8] sm:$0xff]
        %v601 = vadd.f32 %v293, %v294
        %v602 = vadd.f32 %v601, %v295
        %v603 = vadd.f32 %v602, %v296
        %v604 = vadd.f32 %v603, %v297
        %v605 = vadd.f32 %v604, %v298
        %vm606 = vcmask 130048
        %v607 = vsel %vm606, %v299, 0.0
        %v608 = vadd.f32 %v605, %v607
        %609 = vadd.xlane.f32.xlu0 %v608
        %v610 = vpop.xlane.xlu0 %609
        %v611 = vadd.f32 %v300, %v301
        %v612 = vadd.f32 %v611, %v302
        %v613 = vadd.f32 %v612, %v303
        %v614 = vadd.f32 %v613, %v304
        %v615 = vadd.f32 %v614, %v305
        %v616 = vsel %vm606, %v306, 0.0
        %v617 = vadd.f32 %v615, %v616
        %618 = vadd.xlane.f32.xlu0 %v617
        %v619 = vpop.xlane.xlu0 %618
        %v620 = vadd.f32 %v307, %v308
        %v621 = vadd.f32 %v620, %v309
        %v622 = vadd.f32 %v621, %v310
        %v623 = vadd.f32 %v622, %v311
        %v624 = vadd.f32 %v623, %v312
        %v625 = vsel %vm606, %v313, 0.0
        %v626 = vadd.f32 %v624, %v625
        %627 = vadd.xlane.f32.xlu0 %v626
        %v628 = vpop.xlane.xlu0 %627
        %v629 = vadd.f32 %v314, %v315
        %v630 = vadd.f32 %v629, %v316
        %v631 = vadd.f32 %v630, %v317
        %v632 = vadd.f32 %v631, %v318
        %v633 = vadd.f32 %v632, %v319
        %v634 = vsel %vm606, %v320, 0.0
        %v635 = vadd.f32 %v633, %v634
        %636 = vadd.xlane.f32.xlu0 %v635
        %v637 = vpop.xlane.xlu0 %636
        %v638 = vadd.f32 %v321, %v322
        %v639 = vadd.f32 %v638, %v323
        %v640 = vadd.f32 %v639, %v324
        %v641 = vadd.f32 %v640, %v325
        %v642 = vadd.f32 %v641, %v326
        %v643 = vsel %vm606, %v327, 0.0
        %v644 = vadd.f32 %v642, %v643
        %645 = vadd.xlane.f32.xlu0 %v644
        %v646 = vpop.xlane.xlu0 %645
        %v647 = vadd.f32 %v328, %v329
        %v648 = vadd.f32 %v647, %v330
        %v649 = vadd.f32 %v648, %v331
        %v650 = vadd.f32 %v649, %v332
        %v651 = vadd.f32 %v650, %v333
        %v652 = vsel %vm606, %v334, 0.0
        %v653 = vadd.f32 %v651, %v652
        %654 = vadd.xlane.f32.xlu0 %v653
        %v655 = vpop.xlane.xlu0 %654
        %v656 = vadd.f32 %v335, %v336
        %v657 = vadd.f32 %v656, %v337
        %v658 = vadd.f32 %v657, %v338
        %v659 = vadd.f32 %v658, %v339
        %v660 = vadd.f32 %v659, %v340
        %v661 = vsel %vm606, %v341, 0.0
        %v662 = vadd.f32 %v660, %v661
        %663 = vadd.xlane.f32.xlu0 %v662
        %v664 = vpop.xlane.xlu0 %663
        %v665 = vadd.f32 %v342, %v343
        %v666 = vadd.f32 %v665, %v344
        %v667 = vadd.f32 %v666, %v345
        %v668 = vadd.f32 %v667, %v346
        %v669 = vadd.f32 %v668, %v347
        %v670 = vsel %vm606, %v348, 0.0
        %v671 = vadd.f32 %v669, %v670
        %672 = vadd.xlane.f32.xlu0 %v671
        %v673 = vpop.xlane.xlu0 %672
        %v674 = vadd.f32 %v349, %v350
        %v675 = vadd.f32 %v674, %v351
        %v676 = vadd.f32 %v675, %v352
        %v677 = vadd.f32 %v676, %v353
        %v678 = vadd.f32 %v677, %v354
        %v679 = vsel %vm606, %v355, 0.0
        %v680 = vadd.f32 %v678, %v679
        %681 = vadd.xlane.f32.xlu0 %v680
        %v682 = vpop.xlane.xlu0 %681
        %v683 = vadd.f32 %v356, %v357
        %v684 = vadd.f32 %v683, %v358
        %v685 = vadd.f32 %v684, %v359
        %v686 = vadd.f32 %v685, %v360
        %v687 = vadd.f32 %v686, %v361
        %v688 = vsel %vm606, %v362, 0.0
        %v689 = vadd.f32 %v687, %v688
        %690 = vadd.xlane.f32.xlu0 %v689
        %v691 = vpop.xlane.xlu0 %690
        %v692 = vadd.f32 %v363, %v364
        %v693 = vadd.f32 %v692, %v365
        %v694 = vadd.f32 %v693, %v366
        %v695 = vadd.f32 %v694, %v367
        %v696 = vadd.f32 %v695, %v368
        %v697 = vsel %vm606, %v369, 0.0
        %v698 = vadd.f32 %v696, %v697
        %699 = vadd.xlane.f32.xlu0 %v698
        %v700 = vpop.xlane.xlu0 %699
        %v701 = vadd.f32 %v370, %v371
        %v702 = vadd.f32 %v701, %v372
        %v703 = vadd.f32 %v702, %v373
        %v704 = vadd.f32 %v703, %v374
        %v705 = vadd.f32 %v704, %v375
        %v706 = vsel %vm606, %v376, 0.0
        %v707 = vadd.f32 %v705, %v706
        %708 = vadd.xlane.f32.xlu0 %v707
        %v709 = vpop.xlane.xlu0 %708
        %v710 = vadd.f32 %v377, %v378
        %v711 = vadd.f32 %v710, %v379
        %v712 = vadd.f32 %v711, %v380
        %v713 = vadd.f32 %v712, %v381
        %v714 = vadd.f32 %v713, %v382
        %v715 = vsel %vm606, %v383, 0.0
        %v716 = vadd.f32 %v714, %v715
        %717 = vadd.xlane.f32.xlu0 %v716
        %v718 = vpop.xlane.xlu0 %717
        %v719 = vadd.f32 %v384, %v385
        %v720 = vadd.f32 %v719, %v386
        %v721 = vadd.f32 %v720, %v387
        %v722 = vadd.f32 %v721, %v388
        %v723 = vadd.f32 %v722, %v389
        %v724 = vsel %vm606, %v390, 0.0
        %v725 = vadd.f32 %v723, %v724
        %726 = vadd.xlane.f32.xlu0 %v725
        %v727 = vpop.xlane.xlu0 %726
        %v728 = vadd.f32 %v391, %v392
        %v729 = vadd.f32 %v728, %v393
        %v730 = vadd.f32 %v729, %v394
        %v731 = vadd.f32 %v730, %v395
        %v732 = vadd.f32 %v731, %v396
        %v733 = vsel %vm606, %v397, 0.0
        %v734 = vadd.f32 %v732, %v733
        %735 = vadd.xlane.f32.xlu0 %v734
        %v736 = vpop.xlane.xlu0 %735
        %v737 = vadd.f32 %v398, %v399
        %v738 = vadd.f32 %v737, %v400
        %v739 = vadd.f32 %v738, %v401
        %v740 = vadd.f32 %v739, %v402
        %v741 = vadd.f32 %v740, %v403
        %v742 = vsel %vm606, %v404, 0.0
        %v743 = vadd.f32 %v741, %v742
        %744 = vadd.xlane.f32.xlu0 %v743
        %v745 = vpop.xlane.xlu0 %744
        %v746 = vadd.f32 %v405, %v406
        %v747 = vadd.f32 %v746, %v407
        %v748 = vadd.f32 %v747, %v408
        %v749 = vadd.f32 %v748, %v409
        %v750 = vadd.f32 %v749, %v410
        %v751 = vsel %vm606, %v411, 0.0
        %v752 = vadd.f32 %v750, %v751
        %753 = vadd.xlane.f32.xlu0 %v752
        %v754 = vpop.xlane.xlu0 %753
        %v755 = vadd.f32 %v412, %v413
        %v756 = vadd.f32 %v755, %v414
        %v757 = vadd.f32 %v756, %v415
        %v758 = vadd.f32 %v757, %v416
        %v759 = vadd.f32 %v758, %v417
        %v760 = vsel %vm606, %v418, 0.0
        %v761 = vadd.f32 %v759, %v760
        %762 = vadd.xlane.f32.xlu0 %v761
        %v763 = vpop.xlane.xlu0 %762
        %v764 = vadd.f32 %v419, %v420
        %v765 = vadd.f32 %v764, %v421
        %v766 = vadd.f32 %v765, %v422
        %v767 = vadd.f32 %v766, %v423
        %v768 = vadd.f32 %v767, %v424
        %v769 = vsel %vm606, %v425, 0.0
        %v770 = vadd.f32 %v768, %v769
        %771 = vadd.xlane.f32.xlu0 %v770
        %v772 = vpop.xlane.xlu0 %771
        %v773 = vadd.f32 %v426, %v427
        %v774 = vadd.f32 %v773, %v428
        %v775 = vadd.f32 %v774, %v429
        %v776 = vadd.f32 %v775, %v430
        %v777 = vadd.f32 %v776, %v431
        %v778 = vsel %vm606, %v432, 0.0
        %v779 = vadd.f32 %v777, %v778
        %780 = vadd.xlane.f32.xlu0 %v779
        %v781 = vpop.xlane.xlu0 %780
        %v782 = vadd.f32 %v433, %v434
        %v783 = vadd.f32 %v782, %v435
        %v784 = vadd.f32 %v783, %v436
        %v785 = vadd.f32 %v784, %v437
        %v786 = vadd.f32 %v785, %v438
        %v787 = vsel %vm606, %v439, 0.0
        %v788 = vadd.f32 %v786, %v787
        %789 = vadd.xlane.f32.xlu0 %v788
        %v790 = vpop.xlane.xlu0 %789
        %v791 = vadd.f32 %v440, %v441
        %v792 = vadd.f32 %v791, %v442
        %v793 = vadd.f32 %v792, %v443
        %v794 = vadd.f32 %v793, %v444
        %v795 = vadd.f32 %v794, %v445
        %v796 = vsel %vm606, %v446, 0.0
        %v797 = vadd.f32 %v795, %v796
        %798 = vadd.xlane.f32.xlu0 %v797
        %v799 = vpop.xlane.xlu0 %798
        %v800 = vmul.f32 %v610, 0.0012755102
        %v801 = vmul.f32 %v619, 0.0012755102
        %v802 = vmul.f32 %v628, 0.0012755102
        %v803 = vmul.f32 %v637, 0.0012755102
        %v804 = vmul.f32 %v646, 0.0012755102
        %v805 = vmul.f32 %v655, 0.0012755102
        %v806 = vmul.f32 %v664, 0.0012755102
        %v807 = vmul.f32 %v673, 0.0012755102
        %v808 = vmul.f32 %v682, 0.0012755102
        %v809 = vmul.f32 %v691, 0.0012755102
        %v810 = vmul.f32 %v700, 0.0012755102
        %v811 = vmul.f32 %v709, 0.0012755102
        %v812 = vmul.f32 %v718, 0.0012755102
        %v813 = vmul.f32 %v727, 0.0012755102
        %v814 = vmul.f32 %v736, 0.0012755102
        %v815 = vmul.f32 %v745, 0.0012755102
        %v816 = vmul.f32 %v754, 0.0012755102
        %v817 = vmul.f32 %v763, 0.0012755102
        %v818 = vmul.f32 %v772, 0.0012755102
        %v819 = vmul.f32 %v781, 0.0012755102
        %v820 = vmul.f32 %v790, 0.0012755102
        %v821 = vmul.f32 %v799, 0.0012755102
        %v822 = vsub.f32 %v293, %v800
        %v823 = vsub.f32 %v294, %v800
        %v824 = vsub.f32 %v295, %v800
        %v825 = vsub.f32 %v296, %v800
        %v826 = vsub.f32 %v297, %v800
        %v827 = vsub.f32 %v298, %v800
        %v828 = vsub.f32 %v299, %v800
        %v829 = vsub.f32 %v300, %v801
        %v830 = vsub.f32 %v301, %v801
        %v831 = vsub.f32 %v302, %v801
        %v832 = vsub.f32 %v303, %v801
        %v833 = vsub.f32 %v304, %v801
        %v834 = vsub.f32 %v305, %v801
        %v835 = vsub.f32 %v306, %v801
        %v836 = vsub.f32 %v307, %v802
        %v837 = vsub.f32 %v308, %v802
        %v838 = vsub.f32 %v309, %v802
        %v839 = vsub.f32 %v310, %v802
        %v840 = vsub.f32 %v311, %v802
        %v841 = vsub.f32 %v312, %v802
        %v842 = vsub.f32 %v313, %v802
        %v843 = vsub.f32 %v314, %v803
        %v844 = vsub.f32 %v315, %v803
        %v845 = vsub.f32 %v316, %v803
        %v846 = vsub.f32 %v317, %v803
        %v847 = vsub.f32 %v318, %v803
        %v848 = vsub.f32 %v319, %v803
        %v849 = vsub.f32 %v320, %v803
        %v850 = vsub.f32 %v321, %v804
        %v851 = vsub.f32 %v322, %v804
        %v852 = vsub.f32 %v323, %v804
        %v853 = vsub.f32 %v324, %v804
        %v854 = vsub.f32 %v325, %v804
        %v855 = vsub.f32 %v326, %v804
        %v856 = vsub.f32 %v327, %v804
        %v857 = vsub.f32 %v328, %v805
        %v858 = vsub.f32 %v329, %v805
        %v859 = vsub.f32 %v330, %v805
        %v860 = vsub.f32 %v331, %v805
        %v861 = vsub.f32 %v332, %v805
        %v862 = vsub.f32 %v333, %v805
        %v863 = vsub.f32 %v334, %v805
        %v864 = vsub.f32 %v335, %v806
        %v865 = vsub.f32 %v336, %v806
        %v866 = vsub.f32 %v337, %v806
        %v867 = vsub.f32 %v338, %v806
        %v868 = vsub.f32 %v339, %v806
        %v869 = vsub.f32 %v340, %v806
        %v870 = vsub.f32 %v341, %v806
        %v871 = vsub.f32 %v342, %v807
        %v872 = vsub.f32 %v343, %v807
        %v873 = vsub.f32 %v344, %v807
        %v874 = vsub.f32 %v345, %v807
        %v875 = vsub.f32 %v346, %v807
        %v876 = vsub.f32 %v347, %v807
        %v877 = vsub.f32 %v348, %v807
        %v878 = vsub.f32 %v349, %v808
        %v879 = vsub.f32 %v350, %v808
        %v880 = vsub.f32 %v351, %v808
        %v881 = vsub.f32 %v352, %v808
        %v882 = vsub.f32 %v353, %v808
        %v883 = vsub.f32 %v354, %v808
        %v884 = vsub.f32 %v355, %v808
        %v885 = vsub.f32 %v356, %v809
        %v886 = vsub.f32 %v357, %v809
        %v887 = vsub.f32 %v358, %v809
        %v888 = vsub.f32 %v359, %v809
        %v889 = vsub.f32 %v360, %v809
        %v890 = vsub.f32 %v361, %v809
        %v891 = vsub.f32 %v362, %v809
        %v892 = vsub.f32 %v363, %v810
        %v893 = vsub.f32 %v364, %v810
        %v894 = vsub.f32 %v365, %v810
        %v895 = vsub.f32 %v366, %v810
        %v896 = vsub.f32 %v367, %v810
        %v897 = vsub.f32 %v368, %v810
        %v898 = vsub.f32 %v369, %v810
        %v899 = vsub.f32 %v370, %v811
        %v900 = vsub.f32 %v371, %v811
        %v901 = vsub.f32 %v372, %v811
        %v902 = vsub.f32 %v373, %v811
        %v903 = vsub.f32 %v374, %v811
        %v904 = vsub.f32 %v375, %v811
        %v905 = vsub.f32 %v376, %v811
        %v906 = vsub.f32 %v377, %v812
        %v907 = vsub.f32 %v378, %v812
        %v908 = vsub.f32 %v379, %v812
        %v909 = vsub.f32 %v380, %v812
        %v910 = vsub.f32 %v381, %v812
        %v911 = vsub.f32 %v382, %v812
        %v912 = vsub.f32 %v383, %v812
        %v913 = vsub.f32 %v384, %v813
        %v914 = vsub.f32 %v385, %v813
        %v915 = vsub.f32 %v386, %v813
        %v916 = vsub.f32 %v387, %v813
        %v917 = vsub.f32 %v388, %v813
        %v918 = vsub.f32 %v389, %v813
        %v919 = vsub.f32 %v390, %v813
        %v920 = vsub.f32 %v391, %v814
        %v921 = vsub.f32 %v392, %v814
        %v922 = vsub.f32 %v393, %v814
        %v923 = vsub.f32 %v394, %v814
        %v924 = vsub.f32 %v395, %v814
        %v925 = vsub.f32 %v396, %v814
        %v926 = vsub.f32 %v397, %v814
        %v927 = vsub.f32 %v398, %v815
        %v928 = vsub.f32 %v399, %v815
        %v929 = vsub.f32 %v400, %v815
        %v930 = vsub.f32 %v401, %v815
        %v931 = vsub.f32 %v402, %v815
        %v932 = vsub.f32 %v403, %v815
        %v933 = vsub.f32 %v404, %v815
        %v934 = vsub.f32 %v405, %v816
        %v935 = vsub.f32 %v406, %v816
        %v936 = vsub.f32 %v407, %v816
        %v937 = vsub.f32 %v408, %v816
        %v938 = vsub.f32 %v409, %v816
        %v939 = vsub.f32 %v410, %v816
        %v940 = vsub.f32 %v411, %v816
        %v941 = vsub.f32 %v412, %v817
        %v942 = vsub.f32 %v413, %v817
        %v943 = vsub.f32 %v414, %v817
        %v944 = vsub.f32 %v415, %v817
        %v945 = vsub.f32 %v416, %v817
        %v946 = vsub.f32 %v417, %v817
        %v947 = vsub.f32 %v418, %v817
        %v948 = vsub.f32 %v419, %v818
        %v949 = vsub.f32 %v420, %v818
        %v950 = vsub.f32 %v421, %v818
        %v951 = vsub.f32 %v422, %v818
        %v952 = vsub.f32 %v423, %v818
        %v953 = vsub.f32 %v424, %v818
        %v954 = vsub.f32 %v425, %v818
        %v955 = vsub.f32 %v426, %v819
        %v956 = vsub.f32 %v427, %v819
        %v957 = vsub.f32 %v428, %v819
        %v958 = vsub.f32 %v429, %v819
        %v959 = vsub.f32 %v430, %v819
        %v960 = vsub.f32 %v431, %v819
        %v961 = vsub.f32 %v432, %v819
        %v962 = vsub.f32 %v433, %v820
        %v963 = vsub.f32 %v434, %v820
        %v964 = vsub.f32 %v435, %v820
        %v965 = vsub.f32 %v436, %v820
        %v966 = vsub.f32 %v437, %v820
        %v967 = vsub.f32 %v438, %v820
        %v968 = vsub.f32 %v439, %v820
        %v969 = vsub.f32 %v440, %v821
        %v970 = vsub.f32 %v441, %v821
        %v971 = vsub.f32 %v442, %v821
        %v972 = vsub.f32 %v443, %v821
        %v973 = vsub.f32 %v444, %v821
        %v974 = vsub.f32 %v445, %v821
        %v975 = vsub.f32 %v446, %v821
        %v976 = vmul.f32 %v822, %v822
        %v977 = vmul.f32 %v823, %v823
        %v978 = vmul.f32 %v824, %v824
        %v979 = vmul.f32 %v825, %v825
        %v980 = vmul.f32 %v826, %v826
        %v981 = vmul.f32 %v827, %v827
        %v982 = vmul.f32 %v828, %v828
        %v983 = vmul.f32 %v829, %v829
        %v984 = vmul.f32 %v830, %v830
        %v985 = vmul.f32 %v831, %v831
        %v986 = vmul.f32 %v832, %v832
        %v987 = vmul.f32 %v833, %v833
        %v988 = vmul.f32 %v834, %v834
        %v989 = vmul.f32 %v835, %v835
        %v990 = vmul.f32 %v836, %v836
        %v991 = vmul.f32 %v837, %v837
        %v992 = vmul.f32 %v838, %v838
        %v993 = vmul.f32 %v839, %v839
        %v994 = vmul.f32 %v840, %v840
        %v995 = vmul.f32 %v841, %v841
        %v996 = vmul.f32 %v842, %v842
        %v997 = vmul.f32 %v843, %v843
        %v998 = vmul.f32 %v844, %v844
        %v999 = vmul.f32 %v845, %v845
        %v1000 = vmul.f32 %v846, %v846
        %v1001 = vmul.f32 %v847, %v847
        %v1002 = vmul.f32 %v848, %v848
        %v1003 = vmul.f32 %v849, %v849
        %v1004 = vmul.f32 %v850, %v850
        %v1005 = vmul.f32 %v851, %v851
        %v1006 = vmul.f32 %v852, %v852
        %v1007 = vmul.f32 %v853, %v853
        %v1008 = vmul.f32 %v854, %v854
        %v1009 = vmul.f32 %v855, %v855
        %v1010 = vmul.f32 %v856, %v856
        %v1011 = vmul.f32 %v857, %v857
        %v1012 = vmul.f32 %v858, %v858
        %v1013 = vmul.f32 %v859, %v859
        %v1014 = vmul.f32 %v860, %v860
        %v1015 = vmul.f32 %v861, %v861
        %v1016 = vmul.f32 %v862, %v862
        %v1017 = vmul.f32 %v863, %v863
        %v1018 = vmul.f32 %v864, %v864
        %v1019 = vmul.f32 %v865, %v865
        %v1020 = vmul.f32 %v866, %v866
        %v1021 = vmul.f32 %v867, %v867
        %v1022 = vmul.f32 %v868, %v868
        %v1023 = vmul.f32 %v869, %v869
        %v1024 = vmul.f32 %v870, %v870
        %v1025 = vmul.f32 %v871, %v871
        %v1026 = vmul.f32 %v872, %v872
        %v1027 = vmul.f32 %v873, %v873
        %v1028 = vmul.f32 %v874, %v874
        %v1029 = vmul.f32 %v875, %v875
        %v1030 = vmul.f32 %v876, %v876
        %v1031 = vmul.f32 %v877, %v877
        %v1032 = vmul.f32 %v878, %v878
        %v1033 = vmul.f32 %v879, %v879
        %v1034 = vmul.f32 %v880, %v880
        %v1035 = vmul.f32 %v881, %v881
        %v1036 = vmul.f32 %v882, %v882
        %v1037 = vmul.f32 %v883, %v883
        %v1038 = vmul.f32 %v884, %v884
        %v1039 = vmul.f32 %v885, %v885
        %v1040 = vmul.f32 %v886, %v886
        %v1041 = vmul.f32 %v887, %v887
        %v1042 = vmul.f32 %v888, %v888
        %v1043 = vmul.f32 %v889, %v889
        %v1044 = vmul.f32 %v890, %v890
        %v1045 = vmul.f32 %v891, %v891
        %v1046 = vmul.f32 %v892, %v892
        %v1047 = vmul.f32 %v893, %v893
        %v1048 = vmul.f32 %v894, %v894
        %v1049 = vmul.f32 %v895, %v895
        %v1050 = vmul.f32 %v896, %v896
        %v1051 = vmul.f32 %v897, %v897
        %v1052 = vmul.f32 %v898, %v898
        %v1053 = vmul.f32 %v899, %v899
        %v1054 = vmul.f32 %v900, %v900
        %v1055 = vmul.f32 %v901, %v901
        %v1056 = vmul.f32 %v902, %v902
        %v1057 = vmul.f32 %v903, %v903
        %v1058 = vmul.f32 %v904, %v904
        %v1059 = vmul.f32 %v905, %v905
        %v1060 = vmul.f32 %v906, %v906
        %v1061 = vmul.f32 %v907, %v907
        %v1062 = vmul.f32 %v908, %v908
        %v1063 = vmul.f32 %v909, %v909
        %v1064 = vmul.f32 %v910, %v910
        %v1065 = vmul.f32 %v911, %v911
        %v1066 = vmul.f32 %v912, %v912
        %v1067 = vmul.f32 %v913, %v913
        %v1068 = vmul.f32 %v914, %v914
        %v1069 = vmul.f32 %v915, %v915
        %v1070 = vmul.f32 %v916, %v916
        %v1071 = vmul.f32 %v917, %v917
        %v1072 = vmul.f32 %v918, %v918
        %v1073 = vmul.f32 %v919, %v919
        %v1074 = vmul.f32 %v920, %v920
        %v1075 = vmul.f32 %v921, %v921
        %v1076 = vmul.f32 %v922, %v922
        %v1077 = vmul.f32 %v923, %v923
        %v1078 = vmul.f32 %v924, %v924
        %v1079 = vmul.f32 %v925, %v925
        %v1080 = vmul.f32 %v926, %v926
        %v1081 = vmul.f32 %v927, %v927
        %v1082 = vmul.f32 %v928, %v928
        %v1083 = vmul.f32 %v929, %v929
        %v1084 = vmul.f32 %v930, %v930
        %v1085 = vmul.f32 %v931, %v931
        %v1086 = vmul.f32 %v932, %v932
        %v1087 = vmul.f32 %v933, %v933
        %v1088 = vmul.f32 %v934, %v934
        %v1089 = vmul.f32 %v935, %v935
        %v1090 = vmul.f32 %v936, %v936
        %v1091 = vmul.f32 %v937, %v937
        %v1092 = vmul.f32 %v938, %v938
        %v1093 = vmul.f32 %v939, %v939
        %v1094 = vmul.f32 %v940, %v940
        %v1095 = vmul.f32 %v941, %v941
        %v1096 = vmul.f32 %v942, %v942
        %v1097 = vmul.f32 %v943, %v943
        %v1098 = vmul.f32 %v944, %v944
        %v1099 = vmul.f32 %v945, %v945
        %v1100 = vmul.f32 %v946, %v946
        %v1101 = vmul.f32 %v947, %v947
        %v1102 = vmul.f32 %v948, %v948
        %v1103 = vmul.f32 %v949, %v949
        %v1104 = vmul.f32 %v950, %v950
        %v1105 = vmul.f32 %v951, %v951
        %v1106 = vmul.f32 %v952, %v952
        %v1107 = vmul.f32 %v953, %v953
        %v1108 = vmul.f32 %v954, %v954
        %v1109 = vmul.f32 %v955, %v955
        %v1110 = vmul.f32 %v956, %v956
        %v1111 = vmul.f32 %v957, %v957
        %v1112 = vmul.f32 %v958, %v958
        %v1113 = vmul.f32 %v959, %v959
        %v1114 = vmul.f32 %v960, %v960
        %v1115 = vmul.f32 %v961, %v961
        %v1116 = vmul.f32 %v962, %v962
        %v1117 = vmul.f32 %v963, %v963
        %v1118 = vmul.f32 %v964, %v964
        %v1119 = vmul.f32 %v965, %v965
        %v1120 = vmul.f32 %v966, %v966
        %v1121 = vmul.f32 %v967, %v967
        %v1122 = vmul.f32 %v968, %v968
        %v1123 = vmul.f32 %v969, %v969
        %v1124 = vmul.f32 %v970, %v970
        %v1125 = vmul.f32 %v971, %v971
        %v1126 = vmul.f32 %v972, %v972
        %v1127 = vmul.f32 %v973, %v973
        %v1128 = vmul.f32 %v974, %v974
        %v1129 = vmul.f32 %v975, %v975
        %v1130 = vadd.f32 %v976, %v977
        %v1131 = vadd.f32 %v1130, %v978
        %v1132 = vadd.f32 %v1131, %v979
        %v1133 = vadd.f32 %v1132, %v980
        %v1134 = vadd.f32 %v1133, %v981
        %v1135 = vsel %vm606, %v982, 0.0
        %v1136 = vadd.f32 %v1134, %v1135
        %1137 = vadd.xlane.f32.xlu0 %v1136
        %v1138 = vpop.xlane.xlu0 %1137
        %v1139 = vadd.f32 %v983, %v984
        %v1140 = vadd.f32 %v1139, %v985
        %v1141 = vadd.f32 %v1140, %v986
        %v1142 = vadd.f32 %v1141, %v987
        %v1143 = vadd.f32 %v1142, %v988
        %v1144 = vsel %vm606, %v989, 0.0
        %v1145 = vadd.f32 %v1143, %v1144
        %1146 = vadd.xlane.f32.xlu0 %v1145
        %v1147 = vpop.xlane.xlu0 %1146
        %v1148 = vadd.f32 %v990, %v991
        %v1149 = vadd.f32 %v1148, %v992
        %v1150 = vadd.f32 %v1149, %v993
        %v1151 = vadd.f32 %v1150, %v994
        %v1152 = vadd.f32 %v1151, %v995
        %v1153 = vsel %vm606, %v996, 0.0
        %v1154 = vadd.f32 %v1152, %v1153
        %1155 = vadd.xlane.f32.xlu0 %v1154
        %v1156 = vpop.xlane.xlu0 %1155
        %v1157 = vadd.f32 %v997, %v998
        %v1158 = vadd.f32 %v1157, %v999
        %v1159 = vadd.f32 %v1158, %v1000
        %v1160 = vadd.f32 %v1159, %v1001
        %v1161 = vadd.f32 %v1160, %v1002
        %v1162 = vsel %vm606, %v1003, 0.0
        %v1163 = vadd.f32 %v1161, %v1162
        %1164 = vadd.xlane.f32.xlu0 %v1163
        %v1165 = vpop.xlane.xlu0 %1164
        %v1166 = vadd.f32 %v1004, %v1005
        %v1167 = vadd.f32 %v1166, %v1006
        %v1168 = vadd.f32 %v1167, %v1007
        %v1169 = vadd.f32 %v1168, %v1008
        %v1170 = vadd.f32 %v1169, %v1009
        %v1171 = vsel %vm606, %v1010, 0.0
        %v1172 = vadd.f32 %v1170, %v1171
        %1173 = vadd.xlane.f32.xlu0 %v1172
        %v1174 = vpop.xlane.xlu0 %1173
        %v1175 = vadd.f32 %v1011, %v1012
        %v1176 = vadd.f32 %v1175, %v1013
        %v1177 = vadd.f32 %v1176, %v1014
        %v1178 = vadd.f32 %v1177, %v1015
        %v1179 = vadd.f32 %v1178, %v1016
        %v1180 = vsel %vm606, %v1017, 0.0
        %v1181 = vadd.f32 %v1179, %v1180
        %1182 = vadd.xlane.f32.xlu0 %v1181
        %v1183 = vpop.xlane.xlu0 %1182
        %v1184 = vadd.f32 %v1018, %v1019
        %v1185 = vadd.f32 %v1184, %v1020
        %v1186 = vadd.f32 %v1185, %v1021
        %v1187 = vadd.f32 %v1186, %v1022
        %v1188 = vadd.f32 %v1187, %v1023
        %v1189 = vsel %vm606, %v1024, 0.0
        %v1190 = vadd.f32 %v1188, %v1189
        %1191 = vadd.xlane.f32.xlu0 %v1190
        %v1192 = vpop.xlane.xlu0 %1191
        %v1193 = vadd.f32 %v1025, %v1026
        %v1194 = vadd.f32 %v1193, %v1027
        %v1195 = vadd.f32 %v1194, %v1028
        %v1196 = vadd.f32 %v1195, %v1029
        %v1197 = vadd.f32 %v1196, %v1030
        %v1198 = vsel %vm606, %v1031, 0.0
        %v1199 = vadd.f32 %v1197, %v1198
        %1200 = vadd.xlane.f32.xlu0 %v1199
        %v1201 = vpop.xlane.xlu0 %1200
        %v1202 = vadd.f32 %v1032, %v1033
        %v1203 = vadd.f32 %v1202, %v1034
        %v1204 = vadd.f32 %v1203, %v1035
        %v1205 = vadd.f32 %v1204, %v1036
        %v1206 = vadd.f32 %v1205, %v1037
        %v1207 = vsel %vm606, %v1038, 0.0
        %v1208 = vadd.f32 %v1206, %v1207
        %1209 = vadd.xlane.f32.xlu0 %v1208
        %v1210 = vpop.xlane.xlu0 %1209
        %v1211 = vadd.f32 %v1039, %v1040
        %v1212 = vadd.f32 %v1211, %v1041
        %v1213 = vadd.f32 %v1212, %v1042
        %v1214 = vadd.f32 %v1213, %v1043
        %v1215 = vadd.f32 %v1214, %v1044
        %v1216 = vsel %vm606, %v1045, 0.0
        %v1217 = vadd.f32 %v1215, %v1216
        %1218 = vadd.xlane.f32.xlu0 %v1217
        %v1219 = vpop.xlane.xlu0 %1218
        %v1220 = vadd.f32 %v1046, %v1047
        %v1221 = vadd.f32 %v1220, %v1048
        %v1222 = vadd.f32 %v1221, %v1049
        %v1223 = vadd.f32 %v1222, %v1050
        %v1224 = vadd.f32 %v1223, %v1051
        %v1225 = vsel %vm606, %v1052, 0.0
        %v1226 = vadd.f32 %v1224, %v1225
        %1227 = vadd.xlane.f32.xlu0 %v1226
        %v1228 = vpop.xlane.xlu0 %1227
        %v1229 = vadd.f32 %v1053, %v1054
        %v1230 = vadd.f32 %v1229, %v1055
        %v1231 = vadd.f32 %v1230, %v1056
        %v1232 = vadd.f32 %v1231, %v1057
        %v1233 = vadd.f32 %v1232, %v1058
        %v1234 = vsel %vm606, %v1059, 0.0
        %v1235 = vadd.f32 %v1233, %v1234
        %1236 = vadd.xlane.f32.xlu0 %v1235
        %v1237 = vpop.xlane.xlu0 %1236
        %v1238 = vadd.f32 %v1060, %v1061
        %v1239 = vadd.f32 %v1238, %v1062
        %v1240 = vadd.f32 %v1239, %v1063
        %v1241 = vadd.f32 %v1240, %v1064
        %v1242 = vadd.f32 %v1241, %v1065
        %v1243 = vsel %vm606, %v1066, 0.0
        %v1244 = vadd.f32 %v1242, %v1243
        %1245 = vadd.xlane.f32.xlu0 %v1244
        %v1246 = vpop.xlane.xlu0 %1245
        %v1247 = vadd.f32 %v1067, %v1068
        %v1248 = vadd.f32 %v1247, %v1069
        %v1249 = vadd.f32 %v1248, %v1070
        %v1250 = vadd.f32 %v1249, %v1071
        %v1251 = vadd.f32 %v1250, %v1072
        %v1252 = vsel %vm606, %v1073, 0.0
        %v1253 = vadd.f32 %v1251, %v1252
        %1254 = vadd.xlane.f32.xlu0 %v1253
        %v1255 = vpop.xlane.xlu0 %1254
        %v1256 = vadd.f32 %v1074, %v1075
        %v1257 = vadd.f32 %v1256, %v1076
        %v1258 = vadd.f32 %v1257, %v1077
        %v1259 = vadd.f32 %v1258, %v1078
        %v1260 = vadd.f32 %v1259, %v1079
        %v1261 = vsel %vm606, %v1080, 0.0
        %v1262 = vadd.f32 %v1260, %v1261
        %1263 = vadd.xlane.f32.xlu0 %v1262
        %v1264 = vpop.xlane.xlu0 %1263
        %v1265 = vadd.f32 %v1081, %v1082
        %v1266 = vadd.f32 %v1265, %v1083
        %v1267 = vadd.f32 %v1266, %v1084
        %v1268 = vadd.f32 %v1267, %v1085
        %v1269 = vadd.f32 %v1268, %v1086
        %v1270 = vsel %vm606, %v1087, 0.0
        %v1271 = vadd.f32 %v1269, %v1270
        %1272 = vadd.xlane.f32.xlu0 %v1271
        %v1273 = vpop.xlane.xlu0 %1272
        %v1274 = vadd.f32 %v1088, %v1089
        %v1275 = vadd.f32 %v1274, %v1090
        %v1276 = vadd.f32 %v1275, %v1091
        %v1277 = vadd.f32 %v1276, %v1092
        %v1278 = vadd.f32 %v1277, %v1093
        %v1279 = vsel %vm606, %v1094, 0.0
        %v1280 = vadd.f32 %v1278, %v1279
        %1281 = vadd.xlane.f32.xlu0 %v1280
        %v1282 = vpop.xlane.xlu0 %1281
        %v1283 = vadd.f32 %v1095, %v1096
        %v1284 = vadd.f32 %v1283, %v1097
        %v1285 = vadd.f32 %v1284, %v1098
        %v1286 = vadd.f32 %v1285, %v1099
        %v1287 = vadd.f32 %v1286, %v1100
        %v1288 = vsel %vm606, %v1101, 0.0
        %v1289 = vadd.f32 %v1287, %v1288
        %1290 = vadd.xlane.f32.xlu0 %v1289
        %v1291 = vpop.xlane.xlu0 %1290
        %v1292 = vadd.f32 %v1102, %v1103
        %v1293 = vadd.f32 %v1292, %v1104
        %v1294 = vadd.f32 %v1293, %v1105
        %v1295 = vadd.f32 %v1294, %v1106
        %v1296 = vadd.f32 %v1295, %v1107
        %v1297 = vsel %vm606, %v1108, 0.0
        %v1298 = vadd.f32 %v1296, %v1297
        %1299 = vadd.xlane.f32.xlu0 %v1298
        %v1300 = vpop.xlane.xlu0 %1299
        %v1301 = vadd.f32 %v1109, %v1110
        %v1302 = vadd.f32 %v1301, %v1111
        %v1303 = vadd.f32 %v1302, %v1112
        %v1304 = vadd.f32 %v1303, %v1113
        %v1305 = vadd.f32 %v1304, %v1114
        %v1306 = vsel %vm606, %v1115, 0.0
        %v1307 = vadd.f32 %v1305, %v1306
        %1308 = vadd.xlane.f32.xlu0 %v1307
        %v1309 = vpop.xlane.xlu0 %1308
        %v1310 = vadd.f32 %v1116, %v1117
        %v1311 = vadd.f32 %v1310, %v1118
        %v1312 = vadd.f32 %v1311, %v1119
        %v1313 = vadd.f32 %v1312, %v1120
        %v1314 = vadd.f32 %v1313, %v1121
        %v1315 = vsel %vm606, %v1122, 0.0
        %v1316 = vadd.f32 %v1314, %v1315
        %1317 = vadd.xlane.f32.xlu0 %v1316
        %v1318 = vpop.xlane.xlu0 %1317
        %v1319 = vadd.f32 %v1123, %v1124
        %v1320 = vadd.f32 %v1319, %v1125
        %v1321 = vadd.f32 %v1320, %v1126
        %v1322 = vadd.f32 %v1321, %v1127
        %v1323 = vadd.f32 %v1322, %v1128
        %v1324 = vsel %vm606, %v1129, 0.0
        %v1325 = vadd.f32 %v1323, %v1324
        %1326 = vadd.xlane.f32.xlu0 %v1325
        %v1327 = vpop.xlane.xlu0 %1326
        %v1328 = vmul.f32 %v1138, 0.0012755102
        %v1329 = vmul.f32 %v1147, 0.0012755102
        %v1330 = vmul.f32 %v1156, 0.0012755102
        %v1331 = vmul.f32 %v1165, 0.0012755102
        %v1332 = vmul.f32 %v1174, 0.0012755102
        %v1333 = vmul.f32 %v1183, 0.0012755102
        %v1334 = vmul.f32 %v1192, 0.0012755102
        %v1335 = vmul.f32 %v1201, 0.0012755102
        %v1336 = vmul.f32 %v1210, 0.0012755102
        %v1337 = vmul.f32 %v1219, 0.0012755102
        %v1338 = vmul.f32 %v1228, 0.0012755102
        %v1339 = vmul.f32 %v1237, 0.0012755102
        %v1340 = vmul.f32 %v1246, 0.0012755102
        %v1341 = vmul.f32 %v1255, 0.0012755102
        %v1342 = vmul.f32 %v1264, 0.0012755102
        %v1343 = vmul.f32 %v1273, 0.0012755102
        %v1344 = vmul.f32 %v1282, 0.0012755102
        %v1345 = vmul.f32 %v1291, 0.0012755102
        %v1346 = vmul.f32 %v1300, 0.0012755102
        %v1347 = vmul.f32 %v1309, 0.0012755102
        %v1348 = vmul.f32 %v1318, 0.0012755102
        %v1349 = vmul.f32 %v1327, 0.0012755102
        %v1350 = vadd.f32 %v1328, 1e-05
        %v1351 = vadd.f32 %v1329, 1e-05
        %v1352 = vadd.f32 %v1330, 1e-05
        %v1353 = vadd.f32 %v1331, 1e-05
        %v1354 = vadd.f32 %v1332, 1e-05
        %v1355 = vadd.f32 %v1333, 1e-05
        %v1356 = vadd.f32 %v1334, 1e-05
        %v1357 = vadd.f32 %v1335, 1e-05
        %v1358 = vadd.f32 %v1336, 1e-05
        %v1359 = vadd.f32 %v1337, 1e-05
        %v1360 = vadd.f32 %v1338, 1e-05
        %v1361 = vadd.f32 %v1339, 1e-05
        %v1362 = vadd.f32 %v1340, 1e-05
        %v1363 = vadd.f32 %v1341, 1e-05
        %v1364 = vadd.f32 %v1342, 1e-05
        %v1365 = vadd.f32 %v1343, 1e-05
        %v1366 = vadd.f32 %v1344, 1e-05
        %v1367 = vadd.f32 %v1345, 1e-05
        %v1368 = vadd.f32 %v1346, 1e-05
        %v1369 = vadd.f32 %v1347, 1e-05
        %v1370 = vadd.f32 %v1348, 1e-05
        %v1371 = vadd.f32 %v1349, 1e-05
        %v1372 = vrsqrt.pop %v1350
        %v1373 = vrsqrt.pop %v1351
        %v1374 = vrsqrt.pop %v1352
        %v1375 = vrsqrt.pop %v1353
        %v1376 = vrsqrt.pop %v1354
        %v1377 = vrsqrt.pop %v1355
        %v1378 = vrsqrt.pop %v1356
        %v1379 = vrsqrt.pop %v1357
        %v1380 = vrsqrt.pop %v1358
        %v1381 = vrsqrt.pop %v1359
        %v1382 = vrsqrt.pop %v1360
        %v1383 = vrsqrt.pop %v1361
        %v1384 = vrsqrt.pop %v1362
        %v1385 = vrsqrt.pop %v1363
        %v1386 = vrsqrt.pop %v1364
        %v1387 = vrsqrt.pop %v1365
        %v1388 = vrsqrt.pop %v1366
        %v1389 = vrsqrt.pop %v1367
        %v1390 = vrsqrt.pop %v1368
        %v1391 = vrsqrt.pop %v1369
        %v1392 = vrsqrt.pop %v1370
        %v1393 = vrsqrt.pop %v1371
        %v1394 = vld [vmem:[%s281] sm:$0xff]
        %v1395 = vld [vmem:[%s281 + $0x8] sm:$0xff]
        %v1396 = vld [vmem:[%s281 + $0x10] sm:$0xff]
        %v1397 = vld [vmem:[%s281 + $0x18] sm:$0xff]
        %v1398 = vld [vmem:[%s281 + $0x20] sm:$0xff]
        %v1399 = vld [vmem:[%s281 + $0x28] sm:$0xff]
        %v1400 = vld [vmem:[%s281 + $0x30] sm:$0xff]
        %v1401 = vld [vmem:[%s281 + $0x38] sm:$0xff]
        %v1402 = vld [vmem:[%s281 + $0x40] sm:$0xff]
        %v1403 = vld [vmem:[%s281 + $0x48] sm:$0xff]
        %v1404 = vld [vmem:[%s281 + $0x50] sm:$0xff]
        %v1405 = vld [vmem:[%s281 + $0x58] sm:$0xff]
        %v1406 = vld [vmem:[%s281 + $0x60] sm:$0xff]
        %v1407 = vld [vmem:[%s281 + $0x68] sm:$0xff]
        %v1408 = vld [vmem:[%s281 + $0x70] sm:$0xff]
        %v1409 = vld [vmem:[%s281 + $0x78] sm:$0xff]
        %v1410 = vld [vmem:[%s281 + $0x80] sm:$0xff]
        %v1411 = vld [vmem:[%s281 + $0x88] sm:$0xff]
        %v1412 = vld [vmem:[%s281 + $0x90] sm:$0xff]
        %v1413 = vld [vmem:[%s281 + $0x98] sm:$0xff]
        %v1414 = vld [vmem:[%s281 + $0xa0] sm:$0xff]
        %v1415 = vld [vmem:[%s281 + $0xa8] sm:$0xff]
        %v1416 = vmul.f32 %v1394, %v1372
        %v1417 = vmul.f32 %v1395, %v1373
        %v1418 = vmul.f32 %v1396, %v1374
        %v1419 = vmul.f32 %v1397, %v1375
        %v1420 = vmul.f32 %v1398, %v1376
        %v1421 = vmul.f32 %v1399, %v1377
        %v1422 = vmul.f32 %v1400, %v1378
        %v1423 = vmul.f32 %v1401, %v1379
        %v1424 = vmul.f32 %v1402, %v1380
        %v1425 = vmul.f32 %v1403, %v1381
        %v1426 = vmul.f32 %v1404, %v1382
        %v1427 = vmul.f32 %v1405, %v1383
        %v1428 = vmul.f32 %v1406, %v1384
        %v1429 = vmul.f32 %v1407, %v1385
        %v1430 = vmul.f32 %v1408, %v1386
        %v1431 = vmul.f32 %v1409, %v1387
        %v1432 = vmul.f32 %v1410, %v1388
        %v1433 = vmul.f32 %v1411, %v1389
        %v1434 = vmul.f32 %v1412, %v1390
        %v1435 = vmul.f32 %v1413, %v1391
        %v1436 = vmul.f32 %v1414, %v1392
        %v1437 = vmul.f32 %v1415, %v1393
        %1439 = vset.pattern.permute.xlu0 0
        %1440 = vperm.xlu0 %1439, %v1416
        %v1441 = vpop.permute.xlu0 %1440
        %1444 = vset.pattern.permute.xlu0 0
        %1445 = vperm.xlu0 %1444, %v1417
        %v1446 = vpop.permute.xlu0 %1445
        %1449 = vset.pattern.permute.xlu0 0
        %1450 = vperm.xlu0 %1449, %v1418
        %v1451 = vpop.permute.xlu0 %1450
        %1454 = vset.pattern.permute.xlu0 0
        %1455 = vperm.xlu0 %1454, %v1419
        %v1456 = vpop.permute.xlu0 %1455
        %1459 = vset.pattern.permute.xlu0 0
        %1460 = vperm.xlu0 %1459, %v1420
        %v1461 = vpop.permute.xlu0 %1460
        %1464 = vset.pattern.permute.xlu0 0
        %1465 = vperm.xlu0 %1464, %v1421
        %v1466 = vpop.permute.xlu0 %1465
        %1469 = vset.pattern.permute.xlu0 0
        %1470 = vperm.xlu0 %1469, %v1422
        %v1471 = vpop.permute.xlu0 %1470
        %1474 = vset.pattern.permute.xlu0 0
        %1475 = vperm.xlu0 %1474, %v1423
        %v1476 = vpop.permute.xlu0 %1475
        %1479 = vset.pattern.permute.xlu0 0
        %1480 = vperm.xlu0 %1479, %v1424
        %v1481 = vpop.permute.xlu0 %1480
        %1484 = vset.pattern.permute.xlu0 0
        %1485 = vperm.xlu0 %1484, %v1425
        %v1486 = vpop.permute.xlu0 %1485
        %1489 = vset.pattern.permute.xlu0 0
        %1490 = vperm.xlu0 %1489, %v1426
        %v1491 = vpop.permute.xlu0 %1490
        %1494 = vset.pattern.permute.xlu0 0
        %1495 = vperm.xlu0 %1494, %v1427
        %v1496 = vpop.permute.xlu0 %1495
        %1499 = vset.pattern.permute.xlu0 0
        %1500 = vperm.xlu0 %1499, %v1428
        %v1501 = vpop.permute.xlu0 %1500
        %1504 = vset.pattern.permute.xlu0 0
        %1505 = vperm.xlu0 %1504, %v1429
        %v1506 = vpop.permute.xlu0 %1505
        %1509 = vset.pattern.permute.xlu0 0
        %1510 = vperm.xlu0 %1509, %v1430
        %v1511 = vpop.permute.xlu0 %1510
        %1514 = vset.pattern.permute.xlu0 0
        %1515 = vperm.xlu0 %1514, %v1431
        %v1516 = vpop.permute.xlu0 %1515
        %1519 = vset.pattern.permute.xlu0 0
        %1520 = vperm.xlu0 %1519, %v1432
        %v1521 = vpop.permute.xlu0 %1520
        %1524 = vset.pattern.permute.xlu0 0
        %1525 = vperm.xlu0 %1524, %v1433
        %v1526 = vpop.permute.xlu0 %1525
        %1529 = vset.pattern.permute.xlu0 0
        %1530 = vperm.xlu0 %1529, %v1434
        %v1531 = vpop.permute.xlu0 %1530
        %1534 = vset.pattern.permute.xlu0 0
        %1535 = vperm.xlu0 %1534, %v1435
        %v1536 = vpop.permute.xlu0 %1535
        %1539 = vset.pattern.permute.xlu0 0
        %1540 = vperm.xlu0 %1539, %v1436
        %v1541 = vpop.permute.xlu0 %1540
        %1544 = vset.pattern.permute.xlu0 0
        %1545 = vperm.xlu0 %1544, %v1437
        %v1546 = vpop.permute.xlu0 %1545
        %v1548 = vmul.f32 %v822, %v1441
        %v1549 = vmul.f32 %v823, %v1441
        %v1550 = vmul.f32 %v824, %v1441
        %v1551 = vmul.f32 %v825, %v1441
        %v1552 = vmul.f32 %v826, %v1441
        %v1553 = vmul.f32 %v827, %v1441
        %v1554 = vmul.f32 %v828, %v1441
        %v1555 = vmul.f32 %v829, %v1446
        %v1556 = vmul.f32 %v830, %v1446
        %v1557 = vmul.f32 %v831, %v1446
        %v1558 = vmul.f32 %v832, %v1446
        %v1559 = vmul.f32 %v833, %v1446
        %v1560 = vmul.f32 %v834, %v1446
        %v1561 = vmul.f32 %v835, %v1446
        %v1562 = vmul.f32 %v836, %v1451
        %v1563 = vmul.f32 %v837, %v1451
        %v1564 = vmul.f32 %v838, %v1451
        %v1565 = vmul.f32 %v839, %v1451
        %v1566 = vmul.f32 %v840, %v1451
        %v1567 = vmul.f32 %v841, %v1451
        %v1568 = vmul.f32 %v842, %v1451
        %v1569 = vmul.f32 %v843, %v1456
        %v1570 = vmul.f32 %v844, %v1456
        %v1571 = vmul.f32 %v845, %v1456
        %v1572 = vmul.f32 %v846, %v1456
        %v1573 = vmul.f32 %v847, %v1456
        %v1574 = vmul.f32 %v848, %v1456
        %v1575 = vmul.f32 %v849, %v1456
        %v1576 = vmul.f32 %v850, %v1461
        %v1577 = vmul.f32 %v851, %v1461
        %v1578 = vmul.f32 %v852, %v1461
        %v1579 = vmul.f32 %v853, %v1461
        %v1580 = vmul.f32 %v854, %v1461
        %v1581 = vmul.f32 %v855, %v1461
        %v1582 = vmul.f32 %v856, %v1461
        %v1583 = vmul.f32 %v857, %v1466
        %v1584 = vmul.f32 %v858, %v1466
        %v1585 = vmul.f32 %v859, %v1466
        %v1586 = vmul.f32 %v860, %v1466
        %v1587 = vmul.f32 %v861, %v1466
        %v1588 = vmul.f32 %v862, %v1466
        %v1589 = vmul.f32 %v863, %v1466
        %v1590 = vmul.f32 %v864, %v1471
        %v1591 = vmul.f32 %v865, %v1471
        %v1592 = vmul.f32 %v866, %v1471
        %v1593 = vmul.f32 %v867, %v1471
        %v1594 = vmul.f32 %v868, %v1471
        %v1595 = vmul.f32 %v869, %v1471
        %v1596 = vmul.f32 %v870, %v1471
        %v1597 = vmul.f32 %v871, %v1476
        %v1598 = vmul.f32 %v872, %v1476
        %v1599 = vmul.f32 %v873, %v1476
        %v1600 = vmul.f32 %v874, %v1476
        %v1601 = vmul.f32 %v875, %v1476
        %v1602 = vmul.f32 %v876, %v1476
        %v1603 = vmul.f32 %v877, %v1476
        %v1604 = vmul.f32 %v878, %v1481
        %v1605 = vmul.f32 %v879, %v1481
        %v1606 = vmul.f32 %v880, %v1481
        %v1607 = vmul.f32 %v881, %v1481
        %v1608 = vmul.f32 %v882, %v1481
        %v1609 = vmul.f32 %v883, %v1481
        %v1610 = vmul.f32 %v884, %v1481
        %v1611 = vmul.f32 %v885, %v1486
        %v1612 = vmul.f32 %v886, %v1486
        %v1613 = vmul.f32 %v887, %v1486
        %v1614 = vmul.f32 %v888, %v1486
        %v1615 = vmul.f32 %v889, %v1486
        %v1616 = vmul.f32 %v890, %v1486
        %v1617 = vmul.f32 %v891, %v1486
        %v1618 = vmul.f32 %v892, %v1491
        %v1619 = vmul.f32 %v893, %v1491
        %v1620 = vmul.f32 %v894, %v1491
        %v1621 = vmul.f32 %v895, %v1491
        %v1622 = vmul.f32 %v896, %v1491
        %v1623 = vmul.f32 %v897, %v1491
        %v1624 = vmul.f32 %v898, %v1491
        %v1625 = vmul.f32 %v899, %v1496
        %v1626 = vmul.f32 %v900, %v1496
        %v1627 = vmul.f32 %v901, %v1496
        %v1628 = vmul.f32 %v902, %v1496
        %v1629 = vmul.f32 %v903, %v1496
        %v1630 = vmul.f32 %v904, %v1496
        %v1631 = vmul.f32 %v905, %v1496
        %v1632 = vmul.f32 %v906, %v1501
        %v1633 = vmul.f32 %v907, %v1501
        %v1634 = vmul.f32 %v908, %v1501
        %v1635 = vmul.f32 %v909, %v1501
        %v1636 = vmul.f32 %v910, %v1501
        %v1637 = vmul.f32 %v911, %v1501
        %v1638 = vmul.f32 %v912, %v1501
        %v1639 = vmul.f32 %v913, %v1506
        %v1640 = vmul.f32 %v914, %v1506
        %v1641 = vmul.f32 %v915, %v1506
        %v1642 = vmul.f32 %v916, %v1506
        %v1643 = vmul.f32 %v917, %v1506
        %v1644 = vmul.f32 %v918, %v1506
        %v1645 = vmul.f32 %v919, %v1506
        %v1646 = vmul.f32 %v920, %v1511
        %v1647 = vmul.f32 %v921, %v1511
        %v1648 = vmul.f32 %v922, %v1511
        %v1649 = vmul.f32 %v923, %v1511
        %v1650 = vmul.f32 %v924, %v1511
        %v1651 = vmul.f32 %v925, %v1511
        %v1652 = vmul.f32 %v926, %v1511
        %v1653 = vmul.f32 %v927, %v1516
        %v1654 = vmul.f32 %v928, %v1516
        %v1655 = vmul.f32 %v929, %v1516
        %v1656 = vmul.f32 %v930, %v1516
        %v1657 = vmul.f32 %v931, %v1516
        %v1658 = vmul.f32 %v932, %v1516
        %v1659 = vmul.f32 %v933, %v1516
        %v1660 = vmul.f32 %v934, %v1521
        %v1661 = vmul.f32 %v935, %v1521
        %v1662 = vmul.f32 %v936, %v1521
        %v1663 = vmul.f32 %v937, %v1521
        %v1664 = vmul.f32 %v938, %v1521
        %v1665 = vmul.f32 %v939, %v1521
        %v1666 = vmul.f32 %v940, %v1521
        %v1667 = vmul.f32 %v941, %v1526
        %v1668 = vmul.f32 %v942, %v1526
        %v1669 = vmul.f32 %v943, %v1526
        %v1670 = vmul.f32 %v944, %v1526
        %v1671 = vmul.f32 %v945, %v1526
        %v1672 = vmul.f32 %v946, %v1526
        %v1673 = vmul.f32 %v947, %v1526
        %v1674 = vmul.f32 %v948, %v1531
        %v1675 = vmul.f32 %v949, %v1531
        %v1676 = vmul.f32 %v950, %v1531
        %v1677 = vmul.f32 %v951, %v1531
        %v1678 = vmul.f32 %v952, %v1531
        %v1679 = vmul.f32 %v953, %v1531
        %v1680 = vmul.f32 %v954, %v1531
        %v1681 = vmul.f32 %v955, %v1536
        %v1682 = vmul.f32 %v956, %v1536
        %v1683 = vmul.f32 %v957, %v1536
        %v1684 = vmul.f32 %v958, %v1536
        %v1685 = vmul.f32 %v959, %v1536
        %v1686 = vmul.f32 %v960, %v1536
        %v1687 = vmul.f32 %v961, %v1536
        %v1688 = vmul.f32 %v962, %v1541
        %v1689 = vmul.f32 %v963, %v1541
        %v1690 = vmul.f32 %v964, %v1541
        %v1691 = vmul.f32 %v965, %v1541
        %v1692 = vmul.f32 %v966, %v1541
        %v1693 = vmul.f32 %v967, %v1541
        %v1694 = vmul.f32 %v968, %v1541
        %v1695 = vmul.f32 %v969, %v1546
        %v1696 = vmul.f32 %v970, %v1546
        %v1697 = vmul.f32 %v971, %v1546
        %v1698 = vmul.f32 %v972, %v1546
        %v1699 = vmul.f32 %v973, %v1546
        %v1700 = vmul.f32 %v974, %v1546
        %v1701 = vmul.f32 %v975, %v1546
        %1703 = vset.pattern.permute.xlu0 1
        %1704 = vperm.xlu0 %1703, %v1394
        %v1705 = vpop.permute.xlu0 %1704
        %1708 = vset.pattern.permute.xlu0 1
        %1709 = vperm.xlu0 %1708, %v1395
        %v1710 = vpop.permute.xlu0 %1709
        %1713 = vset.pattern.permute.xlu0 1
        %1714 = vperm.xlu0 %1713, %v1396
        %v1715 = vpop.permute.xlu0 %1714
        %1718 = vset.pattern.permute.xlu0 1
        %1719 = vperm.xlu0 %1718, %v1397
        %v1720 = vpop.permute.xlu0 %1719
        %1723 = vset.pattern.permute.xlu0 1
        %1724 = vperm.xlu0 %1723, %v1398
        %v1725 = vpop.permute.xlu0 %1724
        %1728 = vset.pattern.permute.xlu0 1
        %1729 = vperm.xlu0 %1728, %v1399
        %v1730 = vpop.permute.xlu0 %1729
        %1733 = vset.pattern.permute.xlu0 1
        %1734 = vperm.xlu0 %1733, %v1400
        %v1735 = vpop.permute.xlu0 %1734
        %1738 = vset.pattern.permute.xlu0 1
        %1739 = vperm.xlu0 %1738, %v1401
        %v1740 = vpop.permute.xlu0 %1739
        %1743 = vset.pattern.permute.xlu0 1
        %1744 = vperm.xlu0 %1743, %v1402
        %v1745 = vpop.permute.xlu0 %1744
        %1748 = vset.pattern.permute.xlu0 1
        %1749 = vperm.xlu0 %1748, %v1403
        %v1750 = vpop.permute.xlu0 %1749
        %1753 = vset.pattern.permute.xlu0 1
        %1754 = vperm.xlu0 %1753, %v1404
        %v1755 = vpop.permute.xlu0 %1754
        %1758 = vset.pattern.permute.xlu0 1
        %1759 = vperm.xlu0 %1758, %v1405
        %v1760 = vpop.permute.xlu0 %1759
        %1763 = vset.pattern.permute.xlu0 1
        %1764 = vperm.xlu0 %1763, %v1406
        %v1765 = vpop.permute.xlu0 %1764
        %1768 = vset.pattern.permute.xlu0 1
        %1769 = vperm.xlu0 %1768, %v1407
        %v1770 = vpop.permute.xlu0 %1769
        %1773 = vset.pattern.permute.xlu0 1
        %1774 = vperm.xlu0 %1773, %v1408
        %v1775 = vpop.permute.xlu0 %1774
        %1778 = vset.pattern.permute.xlu0 1
        %1779 = vperm.xlu0 %1778, %v1409
        %v1780 = vpop.permute.xlu0 %1779
        %1783 = vset.pattern.permute.xlu0 1
        %1784 = vperm.xlu0 %1783, %v1410
        %v1785 = vpop.permute.xlu0 %1784
        %1788 = vset.pattern.permute.xlu0 1
        %1789 = vperm.xlu0 %1788, %v1411
        %v1790 = vpop.permute.xlu0 %1789
        %1793 = vset.pattern.permute.xlu0 1
        %1794 = vperm.xlu0 %1793, %v1412
        %v1795 = vpop.permute.xlu0 %1794
        %1798 = vset.pattern.permute.xlu0 1
        %1799 = vperm.xlu0 %1798, %v1413
        %v1800 = vpop.permute.xlu0 %1799
        %1803 = vset.pattern.permute.xlu0 1
        %1804 = vperm.xlu0 %1803, %v1414
        %v1805 = vpop.permute.xlu0 %1804
        %1808 = vset.pattern.permute.xlu0 1
        %1809 = vperm.xlu0 %1808, %v1415
        %v1810 = vpop.permute.xlu0 %1809
        %v1812 = vadd.f32 %v1548, %v1705
        %v1813 = vadd.f32 %v1549, %v1705
        %v1814 = vadd.f32 %v1550, %v1705
        %v1815 = vadd.f32 %v1551, %v1705
        %v1816 = vadd.f32 %v1552, %v1705
        %v1817 = vadd.f32 %v1553, %v1705
        %v1818 = vadd.f32 %v1554, %v1705
        %v1819 = vadd.f32 %v1555, %v1710
        %v1820 = vadd.f32 %v1556, %v1710
        %v1821 = vadd.f32 %v1557, %v1710
        %v1822 = vadd.f32 %v1558, %v1710
        %v1823 = vadd.f32 %v1559, %v1710
        %v1824 = vadd.f32 %v1560, %v1710
        %v1825 = vadd.f32 %v1561, %v1710
        %v1826 = vadd.f32 %v1562, %v1715
        %v1827 = vadd.f32 %v1563, %v1715
        %v1828 = vadd.f32 %v1564, %v1715
        %v1829 = vadd.f32 %v1565, %v1715
        %v1830 = vadd.f32 %v1566, %v1715
        %v1831 = vadd.f32 %v1567, %v1715
        %v1832 = vadd.f32 %v1568, %v1715
        %v1833 = vadd.f32 %v1569, %v1720
        %v1834 = vadd.f32 %v1570, %v1720
        %v1835 = vadd.f32 %v1571, %v1720
        %v1836 = vadd.f32 %v1572, %v1720
        %v1837 = vadd.f32 %v1573, %v1720
        %v1838 = vadd.f32 %v1574, %v1720
        %v1839 = vadd.f32 %v1575, %v1720
        %v1840 = vadd.f32 %v1576, %v1725
        %v1841 = vadd.f32 %v1577, %v1725
        %v1842 = vadd.f32 %v1578, %v1725
        %v1843 = vadd.f32 %v1579, %v1725
        %v1844 = vadd.f32 %v1580, %v1725
        %v1845 = vadd.f32 %v1581, %v1725
        %v1846 = vadd.f32 %v1582, %v1725
        %v1847 = vadd.f32 %v1583, %v1730
        %v1848 = vadd.f32 %v1584, %v1730
        %v1849 = vadd.f32 %v1585, %v1730
        %v1850 = vadd.f32 %v1586, %v1730
        %v1851 = vadd.f32 %v1587, %v1730
        %v1852 = vadd.f32 %v1588, %v1730
        %v1853 = vadd.f32 %v1589, %v1730
        %v1854 = vadd.f32 %v1590, %v1735
        %v1855 = vadd.f32 %v1591, %v1735
        %v1856 = vadd.f32 %v1592, %v1735
        %v1857 = vadd.f32 %v1593, %v1735
        %v1858 = vadd.f32 %v1594, %v1735
        %v1859 = vadd.f32 %v1595, %v1735
        %v1860 = vadd.f32 %v1596, %v1735
        %v1861 = vadd.f32 %v1597, %v1740
        %v1862 = vadd.f32 %v1598, %v1740
        %v1863 = vadd.f32 %v1599, %v1740
        %v1864 = vadd.f32 %v1600, %v1740
        %v1865 = vadd.f32 %v1601, %v1740
        %v1866 = vadd.f32 %v1602, %v1740
        %v1867 = vadd.f32 %v1603, %v1740
        %v1868 = vadd.f32 %v1604, %v1745
        %v1869 = vadd.f32 %v1605, %v1745
        %v1870 = vadd.f32 %v1606, %v1745
        %v1871 = vadd.f32 %v1607, %v1745
        %v1872 = vadd.f32 %v1608, %v1745
        %v1873 = vadd.f32 %v1609, %v1745
        %v1874 = vadd.f32 %v1610, %v1745
        %v1875 = vadd.f32 %v1611, %v1750
        %v1876 = vadd.f32 %v1612, %v1750
        %v1877 = vadd.f32 %v1613, %v1750
        %v1878 = vadd.f32 %v1614, %v1750
        %v1879 = vadd.f32 %v1615, %v1750
        %v1880 = vadd.f32 %v1616, %v1750
        %v1881 = vadd.f32 %v1617, %v1750
        %v1882 = vadd.f32 %v1618, %v1755
        %v1883 = vadd.f32 %v1619, %v1755
        %v1884 = vadd.f32 %v1620, %v1755
        %v1885 = vadd.f32 %v1621, %v1755
        %v1886 = vadd.f32 %v1622, %v1755
        %v1887 = vadd.f32 %v1623, %v1755
        %v1888 = vadd.f32 %v1624, %v1755
        %v1889 = vadd.f32 %v1625, %v1760
        %v1890 = vadd.f32 %v1626, %v1760
        %v1891 = vadd.f32 %v1627, %v1760
        %v1892 = vadd.f32 %v1628, %v1760
        %v1893 = vadd.f32 %v1629, %v1760
        %v1894 = vadd.f32 %v1630, %v1760
        %v1895 = vadd.f32 %v1631, %v1760
        %v1896 = vadd.f32 %v1632, %v1765
        %v1897 = vadd.f32 %v1633, %v1765
        %v1898 = vadd.f32 %v1634, %v1765
        %v1899 = vadd.f32 %v1635, %v1765
        %v1900 = vadd.f32 %v1636, %v1765
        %v1901 = vadd.f32 %v1637, %v1765
        %v1902 = vadd.f32 %v1638, %v1765
        %v1903 = vadd.f32 %v1639, %v1770
        %v1904 = vadd.f32 %v1640, %v1770
        %v1905 = vadd.f32 %v1641, %v1770
        %v1906 = vadd.f32 %v1642, %v1770
        %v1907 = vadd.f32 %v1643, %v1770
        %v1908 = vadd.f32 %v1644, %v1770
        %v1909 = vadd.f32 %v1645, %v1770
        %v1910 = vadd.f32 %v1646, %v1775
        %v1911 = vadd.f32 %v1647, %v1775
        %v1912 = vadd.f32 %v1648, %v1775
        %v1913 = vadd.f32 %v1649, %v1775
        %v1914 = vadd.f32 %v1650, %v1775
        %v1915 = vadd.f32 %v1651, %v1775
        %v1916 = vadd.f32 %v1652, %v1775
        %v1917 = vadd.f32 %v1653, %v1780
        %v1918 = vadd.f32 %v1654, %v1780
        %v1919 = vadd.f32 %v1655, %v1780
        %v1920 = vadd.f32 %v1656, %v1780
        %v1921 = vadd.f32 %v1657, %v1780
        %v1922 = vadd.f32 %v1658, %v1780
        %v1923 = vadd.f32 %v1659, %v1780
        %v1924 = vadd.f32 %v1660, %v1785
        %v1925 = vadd.f32 %v1661, %v1785
        %v1926 = vadd.f32 %v1662, %v1785
        %v1927 = vadd.f32 %v1663, %v1785
        %v1928 = vadd.f32 %v1664, %v1785
        %v1929 = vadd.f32 %v1665, %v1785
        %v1930 = vadd.f32 %v1666, %v1785
        %v1931 = vadd.f32 %v1667, %v1790
        %v1932 = vadd.f32 %v1668, %v1790
        %v1933 = vadd.f32 %v1669, %v1790
        %v1934 = vadd.f32 %v1670, %v1790
        %v1935 = vadd.f32 %v1671, %v1790
        %v1936 = vadd.f32 %v1672, %v1790
        %v1937 = vadd.f32 %v1673, %v1790
        %v1938 = vadd.f32 %v1674, %v1795
        %v1939 = vadd.f32 %v1675, %v1795
        %v1940 = vadd.f32 %v1676, %v1795
        %v1941 = vadd.f32 %v1677, %v1795
        %v1942 = vadd.f32 %v1678, %v1795
        %v1943 = vadd.f32 %v1679, %v1795
        %v1944 = vadd.f32 %v1680, %v1795
        %v1945 = vadd.f32 %v1681, %v1800
        %v1946 = vadd.f32 %v1682, %v1800
        %v1947 = vadd.f32 %v1683, %v1800
        %v1948 = vadd.f32 %v1684, %v1800
        %v1949 = vadd.f32 %v1685, %v1800
        %v1950 = vadd.f32 %v1686, %v1800
        %v1951 = vadd.f32 %v1687, %v1800
        %v1952 = vadd.f32 %v1688, %v1805
        %v1953 = vadd.f32 %v1689, %v1805
        %v1954 = vadd.f32 %v1690, %v1805
        %v1955 = vadd.f32 %v1691, %v1805
        %v1956 = vadd.f32 %v1692, %v1805
        %v1957 = vadd.f32 %v1693, %v1805
        %v1958 = vadd.f32 %v1694, %v1805
        %v1959 = vadd.f32 %v1695, %v1810
        %v1960 = vadd.f32 %v1696, %v1810
        %v1961 = vadd.f32 %v1697, %v1810
        %v1962 = vadd.f32 %v1698, %v1810
        %v1963 = vadd.f32 %v1699, %v1810
        %v1964 = vadd.f32 %v1700, %v1810
        %v1965 = vadd.f32 %v1701, %v1810
        %v1966 = vadd.f32 %v1812, %v447
        %v1967 = vadd.f32 %v1813, %v448
        %v1968 = vadd.f32 %v1814, %v449
        %v1969 = vadd.f32 %v1815, %v450
        %v1970 = vadd.f32 %v1816, %v451
        %v1971 = vadd.f32 %v1817, %v452
        %v1972 = vadd.f32 %v1818, %v453
        %v1973 = vadd.f32 %v1819, %v454
        %v1974 = vadd.f32 %v1820, %v455
        %v1975 = vadd.f32 %v1821, %v456
        %v1976 = vadd.f32 %v1822, %v457
        %v1977 = vadd.f32 %v1823, %v458
        %v1978 = vadd.f32 %v1824, %v459
        %v1979 = vadd.f32 %v1825, %v460
        %v1980 = vadd.f32 %v1826, %v461
        %v1981 = vadd.f32 %v1827, %v462
        %v1982 = vadd.f32 %v1828, %v463
        %v1983 = vadd.f32 %v1829, %v464
        %v1984 = vadd.f32 %v1830, %v465
        %v1985 = vadd.f32 %v1831, %v466
        %v1986 = vadd.f32 %v1832, %v467
        %v1987 = vadd.f32 %v1833, %v468
        %v1988 = vadd.f32 %v1834, %v469
        %v1989 = vadd.f32 %v1835, %v470
        %v1990 = vadd.f32 %v1836, %v471
        %v1991 = vadd.f32 %v1837, %v472
        %v1992 = vadd.f32 %v1838, %v473
        %v1993 = vadd.f32 %v1839, %v474
        %v1994 = vadd.f32 %v1840, %v475
        %v1995 = vadd.f32 %v1841, %v476
        %v1996 = vadd.f32 %v1842, %v477
        %v1997 = vadd.f32 %v1843, %v478
        %v1998 = vadd.f32 %v1844, %v479
        %v1999 = vadd.f32 %v1845, %v480
        %v2000 = vadd.f32 %v1846, %v481
        %v2001 = vadd.f32 %v1847, %v482
        %v2002 = vadd.f32 %v1848, %v483
        %v2003 = vadd.f32 %v1849, %v484
        %v2004 = vadd.f32 %v1850, %v485
        %v2005 = vadd.f32 %v1851, %v486
        %v2006 = vadd.f32 %v1852, %v487
        %v2007 = vadd.f32 %v1853, %v488
        %v2008 = vadd.f32 %v1854, %v489
        %v2009 = vadd.f32 %v1855, %v490
        %v2010 = vadd.f32 %v1856, %v491
        %v2011 = vadd.f32 %v1857, %v492
        %v2012 = vadd.f32 %v1858, %v493
        %v2013 = vadd.f32 %v1859, %v494
        %v2014 = vadd.f32 %v1860, %v495
        %v2015 = vadd.f32 %v1861, %v496
        %v2016 = vadd.f32 %v1862, %v497
        %v2017 = vadd.f32 %v1863, %v498
        %v2018 = vadd.f32 %v1864, %v499
        %v2019 = vadd.f32 %v1865, %v500
        %v2020 = vadd.f32 %v1866, %v501
        %v2021 = vadd.f32 %v1867, %v502
        %v2022 = vadd.f32 %v1868, %v503
        %v2023 = vadd.f32 %v1869, %v504
        %v2024 = vadd.f32 %v1870, %v505
        %v2025 = vadd.f32 %v1871, %v506
        %v2026 = vadd.f32 %v1872, %v507
        %v2027 = vadd.f32 %v1873, %v508
        %v2028 = vadd.f32 %v1874, %v509
        %v2029 = vadd.f32 %v1875, %v510
        %v2030 = vadd.f32 %v1876, %v511
        %v2031 = vadd.f32 %v1877, %v512
        %v2032 = vadd.f32 %v1878, %v513
        %v2033 = vadd.f32 %v1879, %v514
        %v2034 = vadd.f32 %v1880, %v515
        %v2035 = vadd.f32 %v1881, %v516
        %v2036 = vadd.f32 %v1882, %v517
        %v2037 = vadd.f32 %v1883, %v518
        %v2038 = vadd.f32 %v1884, %v519
        %v2039 = vadd.f32 %v1885, %v520
        %v2040 = vadd.f32 %v1886, %v521
        %v2041 = vadd.f32 %v1887, %v522
        %v2042 = vadd.f32 %v1888, %v523
        %v2043 = vadd.f32 %v1889, %v524
        %v2044 = vadd.f32 %v1890, %v525
        %v2045 = vadd.f32 %v1891, %v526
        %v2046 = vadd.f32 %v1892, %v527
        %v2047 = vadd.f32 %v1893, %v528
        %v2048 = vadd.f32 %v1894, %v529
        %v2049 = vadd.f32 %v1895, %v530
        %v2050 = vadd.f32 %v1896, %v531
        %v2051 = vadd.f32 %v1897, %v532
        %v2052 = vadd.f32 %v1898, %v533
        %v2053 = vadd.f32 %v1899, %v534
        %v2054 = vadd.f32 %v1900, %v535
        %v2055 = vadd.f32 %v1901, %v536
        %v2056 = vadd.f32 %v1902, %v537
        %v2057 = vadd.f32 %v1903, %v538
        %v2058 = vadd.f32 %v1904, %v539
        %v2059 = vadd.f32 %v1905, %v540
        %v2060 = vadd.f32 %v1906, %v541
        %v2061 = vadd.f32 %v1907, %v542
        %v2062 = vadd.f32 %v1908, %v543
        %v2063 = vadd.f32 %v1909, %v544
        %v2064 = vadd.f32 %v1910, %v545
        %v2065 = vadd.f32 %v1911, %v546
        %v2066 = vadd.f32 %v1912, %v547
        %v2067 = vadd.f32 %v1913, %v548
        %v2068 = vadd.f32 %v1914, %v549
        %v2069 = vadd.f32 %v1915, %v550
        %v2070 = vadd.f32 %v1916, %v551
        %v2071 = vadd.f32 %v1917, %v552
        %v2072 = vadd.f32 %v1918, %v553
        %v2073 = vadd.f32 %v1919, %v554
        %v2074 = vadd.f32 %v1920, %v555
        %v2075 = vadd.f32 %v1921, %v556
        %v2076 = vadd.f32 %v1922, %v557
        %v2077 = vadd.f32 %v1923, %v558
        %v2078 = vadd.f32 %v1924, %v559
        %v2079 = vadd.f32 %v1925, %v560
        %v2080 = vadd.f32 %v1926, %v561
        %v2081 = vadd.f32 %v1927, %v562
        %v2082 = vadd.f32 %v1928, %v563
        %v2083 = vadd.f32 %v1929, %v564
        %v2084 = vadd.f32 %v1930, %v565
        %v2085 = vadd.f32 %v1931, %v566
        %v2086 = vadd.f32 %v1932, %v567
        %v2087 = vadd.f32 %v1933, %v568
        %v2088 = vadd.f32 %v1934, %v569
        %v2089 = vadd.f32 %v1935, %v570
        %v2090 = vadd.f32 %v1936, %v571
        %v2091 = vadd.f32 %v1937, %v572
        %v2092 = vadd.f32 %v1938, %v573
        %v2093 = vadd.f32 %v1939, %v574
        %v2094 = vadd.f32 %v1940, %v575
        %v2095 = vadd.f32 %v1941, %v576
        %v2096 = vadd.f32 %v1942, %v577
        %v2097 = vadd.f32 %v1943, %v578
        %v2098 = vadd.f32 %v1944, %v579
        %v2099 = vadd.f32 %v1945, %v580
        %v2100 = vadd.f32 %v1946, %v581
        %v2101 = vadd.f32 %v1947, %v582
        %v2102 = vadd.f32 %v1948, %v583
        %v2103 = vadd.f32 %v1949, %v584
        %v2104 = vadd.f32 %v1950, %v585
        %v2105 = vadd.f32 %v1951, %v586
        %v2106 = vadd.f32 %v1952, %v587
        %v2107 = vadd.f32 %v1953, %v588
        %v2108 = vadd.f32 %v1954, %v589
        %v2109 = vadd.f32 %v1955, %v590
        %v2110 = vadd.f32 %v1956, %v591
        %v2111 = vadd.f32 %v1957, %v592
        %v2112 = vadd.f32 %v1958, %v593
        %v2113 = vadd.f32 %v1959, %v594
        %v2114 = vadd.f32 %v1960, %v595
        %v2115 = vadd.f32 %v1961, %v596
        %v2116 = vadd.f32 %v1962, %v597
        %v2117 = vadd.f32 %v1963, %v598
        %v2118 = vadd.f32 %v1964, %v599
        %v2119 = vadd.f32 %v1965, %v600
        %v2120 = vmax.f32 %v1966, 0.0
        %v2121 = vmax.f32 %v1967, 0.0
        %v2122 = vmax.f32 %v1968, 0.0
        %v2123 = vmax.f32 %v1969, 0.0
        %v2124 = vmax.f32 %v1970, 0.0
        %v2125 = vmax.f32 %v1971, 0.0
        %v2126 = vmax.f32 %v1972, 0.0
        %v2127 = vmax.f32 %v1973, 0.0
        %v2128 = vmax.f32 %v1974, 0.0
        %v2129 = vmax.f32 %v1975, 0.0
        %v2130 = vmax.f32 %v1976, 0.0
        %v2131 = vmax.f32 %v1977, 0.0
        %v2132 = vmax.f32 %v1978, 0.0
        %v2133 = vmax.f32 %v1979, 0.0
        %v2134 = vmax.f32 %v1980, 0.0
        %v2135 = vmax.f32 %v1981, 0.0
        %v2136 = vmax.f32 %v1982, 0.0
        %v2137 = vmax.f32 %v1983, 0.0
        %v2138 = vmax.f32 %v1984, 0.0
        %v2139 = vmax.f32 %v1985, 0.0
        %v2140 = vmax.f32 %v1986, 0.0
        %v2141 = vmax.f32 %v1987, 0.0
        %v2142 = vmax.f32 %v1988, 0.0
        %v2143 = vmax.f32 %v1989, 0.0
        %v2144 = vmax.f32 %v1990, 0.0
        %v2145 = vmax.f32 %v1991, 0.0
        %v2146 = vmax.f32 %v1992, 0.0
        %v2147 = vmax.f32 %v1993, 0.0
        %v2148 = vmax.f32 %v1994, 0.0
        %v2149 = vmax.f32 %v1995, 0.0
        %v2150 = vmax.f32 %v1996, 0.0
        %v2151 = vmax.f32 %v1997, 0.0
        %v2152 = vmax.f32 %v1998, 0.0
        %v2153 = vmax.f32 %v1999, 0.0
        %v2154 = vmax.f32 %v2000, 0.0
        %v2155 = vmax.f32 %v2001, 0.0
        %v2156 = vmax.f32 %v2002, 0.0
        %v2157 = vmax.f32 %v2003, 0.0
        %v2158 = vmax.f32 %v2004, 0.0
        %v2159 = vmax.f32 %v2005, 0.0
        %v2160 = vmax.f32 %v2006, 0.0
        %v2161 = vmax.f32 %v2007, 0.0
        %v2162 = vmax.f32 %v2008, 0.0
        %v2163 = vmax.f32 %v2009, 0.0
        %v2164 = vmax.f32 %v2010, 0.0
        %v2165 = vmax.f32 %v2011, 0.0
        %v2166 = vmax.f32 %v2012, 0.0
        %v2167 = vmax.f32 %v2013, 0.0
        %v2168 = vmax.f32 %v2014, 0.0
        %v2169 = vmax.f32 %v2015, 0.0
        %v2170 = vmax.f32 %v2016, 0.0
        %v2171 = vmax.f32 %v2017, 0.0
        %v2172 = vmax.f32 %v2018, 0.0
        %v2173 = vmax.f32 %v2019, 0.0
        %v2174 = vmax.f32 %v2020, 0.0
        %v2175 = vmax.f32 %v2021, 0.0
        %v2176 = vmax.f32 %v2022, 0.0
        %v2177 = vmax.f32 %v2023, 0.0
        %v2178 = vmax.f32 %v2024, 0.0
        %v2179 = vmax.f32 %v2025, 0.0
        %v2180 = vmax.f32 %v2026, 0.0
        %v2181 = vmax.f32 %v2027, 0.0
        %v2182 = vmax.f32 %v2028, 0.0
        %v2183 = vmax.f32 %v2029, 0.0
        %v2184 = vmax.f32 %v2030, 0.0
        %v2185 = vmax.f32 %v2031, 0.0
        %v2186 = vmax.f32 %v2032, 0.0
        %v2187 = vmax.f32 %v2033, 0.0
        %v2188 = vmax.f32 %v2034, 0.0
        %v2189 = vmax.f32 %v2035, 0.0
        %v2190 = vmax.f32 %v2036, 0.0
        %v2191 = vmax.f32 %v2037, 0.0
        %v2192 = vmax.f32 %v2038, 0.0
        %v2193 = vmax.f32 %v2039, 0.0
        %v2194 = vmax.f32 %v2040, 0.0
        %v2195 = vmax.f32 %v2041, 0.0
        %v2196 = vmax.f32 %v2042, 0.0
        %v2197 = vmax.f32 %v2043, 0.0
        %v2198 = vmax.f32 %v2044, 0.0
        %v2199 = vmax.f32 %v2045, 0.0
        %v2200 = vmax.f32 %v2046, 0.0
        %v2201 = vmax.f32 %v2047, 0.0
        %v2202 = vmax.f32 %v2048, 0.0
        %v2203 = vmax.f32 %v2049, 0.0
        %v2204 = vmax.f32 %v2050, 0.0
        %v2205 = vmax.f32 %v2051, 0.0
        %v2206 = vmax.f32 %v2052, 0.0
        %v2207 = vmax.f32 %v2053, 0.0
        %v2208 = vmax.f32 %v2054, 0.0
        %v2209 = vmax.f32 %v2055, 0.0
        %v2210 = vmax.f32 %v2056, 0.0
        %v2211 = vmax.f32 %v2057, 0.0
        %v2212 = vmax.f32 %v2058, 0.0
        %v2213 = vmax.f32 %v2059, 0.0
        %v2214 = vmax.f32 %v2060, 0.0
        %v2215 = vmax.f32 %v2061, 0.0
        %v2216 = vmax.f32 %v2062, 0.0
        %v2217 = vmax.f32 %v2063, 0.0
        %v2218 = vmax.f32 %v2064, 0.0
        %v2219 = vmax.f32 %v2065, 0.0
        %v2220 = vmax.f32 %v2066, 0.0
        %v2221 = vmax.f32 %v2067, 0.0
        %v2222 = vmax.f32 %v2068, 0.0
        %v2223 = vmax.f32 %v2069, 0.0
        %v2224 = vmax.f32 %v2070, 0.0
        %v2225 = vmax.f32 %v2071, 0.0
        %v2226 = vmax.f32 %v2072, 0.0
        %v2227 = vmax.f32 %v2073, 0.0
        %v2228 = vmax.f32 %v2074, 0.0
        %v2229 = vmax.f32 %v2075, 0.0
        %v2230 = vmax.f32 %v2076, 0.0
        %v2231 = vmax.f32 %v2077, 0.0
        %v2232 = vmax.f32 %v2078, 0.0
        %v2233 = vmax.f32 %v2079, 0.0
        %v2234 = vmax.f32 %v2080, 0.0
        %v2235 = vmax.f32 %v2081, 0.0
        %v2236 = vmax.f32 %v2082, 0.0
        %v2237 = vmax.f32 %v2083, 0.0
        %v2238 = vmax.f32 %v2084, 0.0
        %v2239 = vmax.f32 %v2085, 0.0
        %v2240 = vmax.f32 %v2086, 0.0
        %v2241 = vmax.f32 %v2087, 0.0
        %v2242 = vmax.f32 %v2088, 0.0
        %v2243 = vmax.f32 %v2089, 0.0
        %v2244 = vmax.f32 %v2090, 0.0
        %v2245 = vmax.f32 %v2091, 0.0
        %v2246 = vmax.f32 %v2092, 0.0
        %v2247 = vmax.f32 %v2093, 0.0
        %v2248 = vmax.f32 %v2094, 0.0
        %v2249 = vmax.f32 %v2095, 0.0
        %v2250 = vmax.f32 %v2096, 0.0
        %v2251 = vmax.f32 %v2097, 0.0
        %v2252 = vmax.f32 %v2098, 0.0
        %v2253 = vmax.f32 %v2099, 0.0
        %v2254 = vmax.f32 %v2100, 0.0
        %v2255 = vmax.f32 %v2101, 0.0
        %v2256 = vmax.f32 %v2102, 0.0
        %v2257 = vmax.f32 %v2103, 0.0
        %v2258 = vmax.f32 %v2104, 0.0
        %v2259 = vmax.f32 %v2105, 0.0
        %v2260 = vmax.f32 %v2106, 0.0
        %v2261 = vmax.f32 %v2107, 0.0
        %v2262 = vmax.f32 %v2108, 0.0
        %v2263 = vmax.f32 %v2109, 0.0
        %v2264 = vmax.f32 %v2110, 0.0
        %v2265 = vmax.f32 %v2111, 0.0
        %v2266 = vmax.f32 %v2112, 0.0
        %v2267 = vmax.f32 %v2113, 0.0
        %v2268 = vmax.f32 %v2114, 0.0
        %v2269 = vmax.f32 %v2115, 0.0
        %v2270 = vmax.f32 %v2116, 0.0
        %v2271 = vmax.f32 %v2117, 0.0
        %v2272 = vmax.f32 %v2118, 0.0
        %v2273 = vmax.f32 %v2119, 0.0
        %2274 = vst [vmem:[%s238] sm:$0xff] %v2120
        %2275 = vst [vmem:[%s238 + $0x8] sm:$0xff] %v2121
        %2276 = vst [vmem:[%s238 + $0x10] sm:$0xff] %v2122
        %2277 = vst [vmem:[%s238 + $0x18] sm:$0xff] %v2123
        %2278 = vst [vmem:[%s238 + $0x20] sm:$0xff] %v2124
        %2279 = vst [vmem:[%s238 + $0x28] sm:$0xff] %v2125
        %2280 = vst.msk [vmem:[%s238 + $0x30] sm:$0xff] %vm606, %v2126
        %2281 = vst [vmem:[%s238 + $0x38] sm:$0xff] %v2127
        %2282 = vst [vmem:[%s238 + $0x40] sm:$0xff] %v2128
        %2283 = vst [vmem:[%s238 + $0x48] sm:$0xff] %v2129
        %2284 = vst [vmem:[%s238 + $0x50] sm:$0xff] %v2130
        %2285 = vst [vmem:[%s238 + $0x58] sm:$0xff] %v2131
        %2286 = vst [vmem:[%s238 + $0x60] sm:$0xff] %v2132
        %2287 = vst.msk [vmem:[%s238 + $0x68] sm:$0xff] %vm606, %v2133
        %2288 = vst [vmem:[%s238 + $0x70] sm:$0xff] %v2134
        %2289 = vst [vmem:[%s238 + $0x78] sm:$0xff] %v2135
        %2290 = vst [vmem:[%s238 + $0x80] sm:$0xff] %v2136
        %2291 = vst [vmem:[%s238 + $0x88] sm:$0xff] %v2137
        %2292 = vst [vmem:[%s238 + $0x90] sm:$0xff] %v2138
        %2293 = vst [vmem:[%s238 + $0x98] sm:$0xff] %v2139
        %2294 = vst.msk [vmem:[%s238 + $0xa0] sm:$0xff] %vm606, %v2140
        %2295 = vst [vmem:[%s238 + $0xa8] sm:$0xff] %v2141
        %2296 = vst [vmem:[%s238 + $0xb0] sm:$0xff] %v2142
        %2297 = vst [vmem:[%s238 + $0xb8] sm:$0xff] %v2143
        %2298 = vst [vmem:[%s238 + $0xc0] sm:$0xff] %v2144
        %2299 = vst [vmem:[%s238 + $0xc8] sm:$0xff] %v2145
        %2300 = vst [vmem:[%s238 + $0xd0] sm:$0xff] %v2146
        %2301 = vst.msk [vmem:[%s238 + $0xd8] sm:$0xff] %vm606, %v2147
        %2302 = vst [vmem:[%s238 + $0xe0] sm:$0xff] %v2148
        %2303 = vst [vmem:[%s238 + $0xe8] sm:$0xff] %v2149
        %2304 = vst [vmem:[%s238 + $0xf0] sm:$0xff] %v2150
        %2305 = vst [vmem:[%s238 + $0xf8] sm:$0xff] %v2151
        %2306 = vst [vmem:[%s238 + $0x100] sm:$0xff] %v2152
        %2307 = vst [vmem:[%s238 + $0x108] sm:$0xff] %v2153
        %2308 = vst.msk [vmem:[%s238 + $0x110] sm:$0xff] %vm606, %v2154
        %2309 = vst [vmem:[%s238 + $0x118] sm:$0xff] %v2155
        %2310 = vst [vmem:[%s238 + $0x120] sm:$0xff] %v2156
        %2311 = vst [vmem:[%s238 + $0x128] sm:$0xff] %v2157
        %2312 = vst [vmem:[%s238 + $0x130] sm:$0xff] %v2158
        %2313 = vst [vmem:[%s238 + $0x138] sm:$0xff] %v2159
        %2314 = vst [vmem:[%s238 + $0x140] sm:$0xff] %v2160
        %2315 = vst.msk [vmem:[%s238 + $0x148] sm:$0xff] %vm606, %v2161
        %2316 = vst [vmem:[%s238 + $0x150] sm:$0xff] %v2162
        %2317 = vst [vmem:[%s238 + $0x158] sm:$0xff] %v2163
        %2318 = vst [vmem:[%s238 + $0x160] sm:$0xff] %v2164
        %2319 = vst [vmem:[%s238 + $0x168] sm:$0xff] %v2165
        %2320 = vst [vmem:[%s238 + $0x170] sm:$0xff] %v2166
        %2321 = vst [vmem:[%s238 + $0x178] sm:$0xff] %v2167
        %2322 = vst.msk [vmem:[%s238 + $0x180] sm:$0xff] %vm606, %v2168
        %2323 = vst [vmem:[%s238 + $0x188] sm:$0xff] %v2169
        %2324 = vst [vmem:[%s238 + $0x190] sm:$0xff] %v2170
        %2325 = vst [vmem:[%s238 + $0x198] sm:$0xff] %v2171
        %2326 = vst [vmem:[%s238 + $0x1a0] sm:$0xff] %v2172
        %2327 = vst [vmem:[%s238 + $0x1a8] sm:$0xff] %v2173
        %2328 = vst [vmem:[%s238 + $0x1b0] sm:$0xff] %v2174
        %2329 = vst.msk [vmem:[%s238 + $0x1b8] sm:$0xff] %vm606, %v2175
        %2330 = vst [vmem:[%s238 + $0x1c0] sm:$0xff] %v2176
        %2331 = vst [vmem:[%s238 + $0x1c8] sm:$0xff] %v2177
        %2332 = vst [vmem:[%s238 + $0x1d0] sm:$0xff] %v2178
        %2333 = vst [vmem:[%s238 + $0x1d8] sm:$0xff] %v2179
        %2334 = vst [vmem:[%s238 + $0x1e0] sm:$0xff] %v2180
        %2335 = vst [vmem:[%s238 + $0x1e8] sm:$0xff] %v2181
        %2336 = vst.msk [vmem:[%s238 + $0x1f0] sm:$0xff] %vm606, %v2182
        %2337 = vst [vmem:[%s238 + $0x1f8] sm:$0xff] %v2183
        %2338 = vst [vmem:[%s238 + $0x200] sm:$0xff] %v2184
        %2339 = vst [vmem:[%s238 + $0x208] sm:$0xff] %v2185
        %2340 = vst [vmem:[%s238 + $0x210] sm:$0xff] %v2186
        %2341 = vst [vmem:[%s238 + $0x218] sm:$0xff] %v2187
        %2342 = vst [vmem:[%s238 + $0x220] sm:$0xff] %v2188
        %2343 = vst.msk [vmem:[%s238 + $0x228] sm:$0xff] %vm606, %v2189
        %2344 = vst [vmem:[%s238 + $0x230] sm:$0xff] %v2190
        %2345 = vst [vmem:[%s238 + $0x238] sm:$0xff] %v2191
        %2346 = vst [vmem:[%s238 + $0x240] sm:$0xff] %v2192
        %2347 = vst [vmem:[%s238 + $0x248] sm:$0xff] %v2193
        %2348 = vst [vmem:[%s238 + $0x250] sm:$0xff] %v2194
        %2349 = vst [vmem:[%s238 + $0x258] sm:$0xff] %v2195
        %2350 = vst.msk [vmem:[%s238 + $0x260] sm:$0xff] %vm606, %v2196
        %2351 = vst [vmem:[%s238 + $0x268] sm:$0xff] %v2197
        %2352 = vst [vmem:[%s238 + $0x270] sm:$0xff] %v2198
        %2353 = vst [vmem:[%s238 + $0x278] sm:$0xff] %v2199
        %2354 = vst [vmem:[%s238 + $0x280] sm:$0xff] %v2200
        %2355 = vst [vmem:[%s238 + $0x288] sm:$0xff] %v2201
        %2356 = vst [vmem:[%s238 + $0x290] sm:$0xff] %v2202
        %2357 = vst.msk [vmem:[%s238 + $0x298] sm:$0xff] %vm606, %v2203
        %2358 = vst [vmem:[%s238 + $0x2a0] sm:$0xff] %v2204
        %2359 = vst [vmem:[%s238 + $0x2a8] sm:$0xff] %v2205
        %2360 = vst [vmem:[%s238 + $0x2b0] sm:$0xff] %v2206
        %2361 = vst [vmem:[%s238 + $0x2b8] sm:$0xff] %v2207
        %2362 = vst [vmem:[%s238 + $0x2c0] sm:$0xff] %v2208
        %2363 = vst [vmem:[%s238 + $0x2c8] sm:$0xff] %v2209
        %2364 = vst.msk [vmem:[%s238 + $0x2d0] sm:$0xff] %vm606, %v2210
        %2365 = vst [vmem:[%s238 + $0x2d8] sm:$0xff] %v2211
        %2366 = vst [vmem:[%s238 + $0x2e0] sm:$0xff] %v2212
        %2367 = vst [vmem:[%s238 + $0x2e8] sm:$0xff] %v2213
        %2368 = vst [vmem:[%s238 + $0x2f0] sm:$0xff] %v2214
        %2369 = vst [vmem:[%s238 + $0x2f8] sm:$0xff] %v2215
        %2370 = vst [vmem:[%s238 + $0x300] sm:$0xff] %v2216
        %2371 = vst.msk [vmem:[%s238 + $0x308] sm:$0xff] %vm606, %v2217
        %2372 = vst [vmem:[%s238 + $0x310] sm:$0xff] %v2218
        %2373 = vst [vmem:[%s238 + $0x318] sm:$0xff] %v2219
        %2374 = vst [vmem:[%s238 + $0x320] sm:$0xff] %v2220
        %2375 = vst [vmem:[%s238 + $0x328] sm:$0xff] %v2221
        %2376 = vst [vmem:[%s238 + $0x330] sm:$0xff] %v2222
        %2377 = vst [vmem:[%s238 + $0x338] sm:$0xff] %v2223
        %2378 = vst.msk [vmem:[%s238 + $0x340] sm:$0xff] %vm606, %v2224
        %2379 = vst [vmem:[%s238 + $0x348] sm:$0xff] %v2225
        %2380 = vst [vmem:[%s238 + $0x350] sm:$0xff] %v2226
        %2381 = vst [vmem:[%s238 + $0x358] sm:$0xff] %v2227
        %2382 = vst [vmem:[%s238 + $0x360] sm:$0xff] %v2228
        %2383 = vst [vmem:[%s238 + $0x368] sm:$0xff] %v2229
        %2384 = vst [vmem:[%s238 + $0x370] sm:$0xff] %v2230
        %2385 = vst.msk [vmem:[%s238 + $0x378] sm:$0xff] %vm606, %v2231
        %2386 = vst [vmem:[%s238 + $0x380] sm:$0xff] %v2232
        %2387 = vst [vmem:[%s238 + $0x388] sm:$0xff] %v2233
        %2388 = vst [vmem:[%s238 + $0x390] sm:$0xff] %v2234
        %2389 = vst [vmem:[%s238 + $0x398] sm:$0xff] %v2235
        %2390 = vst [vmem:[%s238 + $0x3a0] sm:$0xff] %v2236
        %2391 = vst [vmem:[%s238 + $0x3a8] sm:$0xff] %v2237
        %2392 = vst.msk [vmem:[%s238 + $0x3b0] sm:$0xff] %vm606, %v2238
        %2393 = vst [vmem:[%s238 + $0x3b8] sm:$0xff] %v2239
        %2394 = vst [vmem:[%s238 + $0x3c0] sm:$0xff] %v2240
        %2395 = vst [vmem:[%s238 + $0x3c8] sm:$0xff] %v2241
        %2396 = vst [vmem:[%s238 + $0x3d0] sm:$0xff] %v2242
        %2397 = vst [vmem:[%s238 + $0x3d8] sm:$0xff] %v2243
        %2398 = vst [vmem:[%s238 + $0x3e0] sm:$0xff] %v2244
        %2399 = vst.msk [vmem:[%s238 + $0x3e8] sm:$0xff] %vm606, %v2245
        %2400 = vst [vmem:[%s238 + $0x3f0] sm:$0xff] %v2246
        %2401 = vst [vmem:[%s238 + $0x3f8] sm:$0xff] %v2247
        %2402 = vst [vmem:[%s238 + $0x400] sm:$0xff] %v2248
        %2403 = vst [vmem:[%s238 + $0x408] sm:$0xff] %v2249
        %2404 = vst [vmem:[%s238 + $0x410] sm:$0xff] %v2250
        %2405 = vst [vmem:[%s238 + $0x418] sm:$0xff] %v2251
        %2406 = vst.msk [vmem:[%s238 + $0x420] sm:$0xff] %vm606, %v2252
        %2407 = vst [vmem:[%s238 + $0x428] sm:$0xff] %v2253
        %2408 = vst [vmem:[%s238 + $0x430] sm:$0xff] %v2254
        %2409 = vst [vmem:[%s238 + $0x438] sm:$0xff] %v2255
        %2410 = vst [vmem:[%s238 + $0x440] sm:$0xff] %v2256
        %2411 = vst [vmem:[%s238 + $0x448] sm:$0xff] %v2257
        %2412 = vst [vmem:[%s238 + $0x450] sm:$0xff] %v2258
        %2413 = vst.msk [vmem:[%s238 + $0x458] sm:$0xff] %vm606, %v2259
        %2414 = vst [vmem:[%s238 + $0x460] sm:$0xff] %v2260
        %2415 = vst [vmem:[%s238 + $0x468] sm:$0xff] %v2261
        %2416 = vst [vmem:[%s238 + $0x470] sm:$0xff] %v2262
        %2417 = vst [vmem:[%s238 + $0x478] sm:$0xff] %v2263
        %2418 = vst [vmem:[%s238 + $0x480] sm:$0xff] %v2264
        %2419 = vst [vmem:[%s238 + $0x488] sm:$0xff] %v2265
        %2420 = vst.msk [vmem:[%s238 + $0x490] sm:$0xff] %vm606, %v2266
        %2421 = vst [vmem:[%s238 + $0x498] sm:$0xff] %v2267
        %2422 = vst [vmem:[%s238 + $0x4a0] sm:$0xff] %v2268
        %2423 = vst [vmem:[%s238 + $0x4a8] sm:$0xff] %v2269
        %2424 = vst [vmem:[%s238 + $0x4b0] sm:$0xff] %v2270
        %2425 = vst [vmem:[%s238 + $0x4b8] sm:$0xff] %v2271
        %2426 = vst [vmem:[%s238 + $0x4c0] sm:$0xff] %v2272
        %2427 = vst.msk [vmem:[%s238 + $0x4c8] sm:$0xff] %vm606, %v2273
        %s2428 = sand.u32 %s100, 1
        %s2429 = sand.u32 %s100, 1
        %s2430 = smul.addr %s2429, 1232
        %s2431 = scalar_lea.vmem [#allocation2], %s2430
        // Predicated region
        $region33: #{bn_add_relu.1} parent=31 // pred_check
          %p2432 = pneg %p110
        $region34: #{bn_add_relu.1} parent=31 // pred_check_branch
          %2434 = sbr.rel (%p2432) target = $region36
        $region35: #{bn_add_relu.1} parent=31 // pred_region
          %s2435 = smul.u32 22, %s14
          %s2436 = ssub.s32 87, %s2435
          %p2437 = scmp.lt.s32.totalorder %s2436, 22
          %s2438 = scalar_select %p2437, %s2436, 22
          %s2439 = smul.u32 128, %s2438
          %s2440 = smul.u32 %s2439, 7
          %p2441 = scmp.ne.s32.totalorder 0, %s2440
          %s2442 = smul.addr %s2435, 7
          %s2443 = smul.addr %s2442, 8
          %s2444 = scalar_lea.vmem %s3, %s2443
          // Predicated region
          $region37: #{bn_add_relu.1} parent=35 // pred_check
            %p2445 = pneg %p2441
          $region38: #{bn_add_relu.1} parent=35 // pred_check_branch
            %2447 = sbr.rel (%p2445) target = $region40
          $region39: #{bn_add_relu.1} parent=35 // pred_region
            // Predicated region
            $region41: #{bn_add_relu.1} parent=39 // pred_check
              _
            $region42: #{bn_add_relu.1} parent=39 // pred_check_branch
              %2449 = sbr.rel (0) target = $region44
            $region43: #{bn_add_relu.1} parent=39 // pred_region
              %s2450 = sdiv.u32.pop %s2438, 10
              %s2451 = srem.u32.pop %s2438, 10
              // While loop
              $region45: #{bn_add_relu.1} parent=43 // loop_pre_header
                _
              $region46: #{bn_add_relu.1} parent=43 // loop_header
                %s2453 = sphi 0, %s2455
                %p2454 = scmp.ge.s32.totalorder %s2453, %s2450
                %s2458 = sphi 0, %s2603
                %s2459 = sphi %s2431, %s2606
                %s2460 = sphi %s2444, %s2607
              $region47: #{bn_add_relu.1} parent=43 // loop_header_branch
                %2457 = sbr.rel (%p2454) target = $region51
              $region48: #{bn_add_relu.1} parent=43 // loop_body
                %v2461 = vld [vmem:[%s2459] sm:$0xff]
                %2462 = vst [vmem:[%s2460] sm:$0xff] %v2461
                %v2463 = vld [vmem:[%s2459 + $0x38] sm:$0xff]
                %2464 = vst [vmem:[%s2460 + $0x38] sm:$0xff] %v2463
                %v2465 = vld [vmem:[%s2459 + $0x70] sm:$0xff]
                %2466 = vst [vmem:[%s2460 + $0x70] sm:$0xff] %v2465
                %v2467 = vld [vmem:[%s2459 + $0xa8] sm:$0xff]
                %2468 = vst [vmem:[%s2460 + $0xa8] sm:$0xff] %v2467
                %v2469 = vld [vmem:[%s2459 + $0xe0] sm:$0xff]
                %2470 = vst [vmem:[%s2460 + $0xe0] sm:$0xff] %v2469
                %v2471 = vld [vmem:[%s2459 + $0x118] sm:$0xff]
                %2472 = vst [vmem:[%s2460 + $0x118] sm:$0xff] %v2471
                %v2473 = vld [vmem:[%s2459 + $0x150] sm:$0xff]
                %2474 = vst [vmem:[%s2460 + $0x150] sm:$0xff] %v2473
                %v2475 = vld [vmem:[%s2459 + $0x188] sm:$0xff]
                %2476 = vst [vmem:[%s2460 + $0x188] sm:$0xff] %v2475
                %v2477 = vld [vmem:[%s2459 + $0x1c0] sm:$0xff]
                %2478 = vst [vmem:[%s2460 + $0x1c0] sm:$0xff] %v2477
                %v2479 = vld [vmem:[%s2459 + $0x1f8] sm:$0xff]
                %2480 = vst [vmem:[%s2460 + $0x1f8] sm:$0xff] %v2479
                %v2481 = vld [vmem:[%s2459 + $0x8] sm:$0xff]
                %2482 = vst [vmem:[%s2460 + $0x8] sm:$0xff] %v2481
                %v2483 = vld [vmem:[%s2459 + $0x40] sm:$0xff]
                %2484 = vst [vmem:[%s2460 + $0x40] sm:$0xff] %v2483
                %v2485 = vld [vmem:[%s2459 + $0x78] sm:$0xff]
                %2486 = vst [vmem:[%s2460 + $0x78] sm:$0xff] %v2485
                %v2487 = vld [vmem:[%s2459 + $0xb0] sm:$0xff]
                %2488 = vst [vmem:[%s2460 + $0xb0] sm:$0xff] %v2487
                %v2489 = vld [vmem:[%s2459 + $0xe8] sm:$0xff]
                %2490 = vst [vmem:[%s2460 + $0xe8] sm:$0xff] %v2489
                %v2491 = vld [vmem:[%s2459 + $0x120] sm:$0xff]
                %2492 = vst [vmem:[%s2460 + $0x120] sm:$0xff] %v2491
                %v2493 = vld [vmem:[%s2459 + $0x158] sm:$0xff]
                %2494 = vst [vmem:[%s2460 + $0x158] sm:$0xff] %v2493
                %v2495 = vld [vmem:[%s2459 + $0x190] sm:$0xff]
                %2496 = vst [vmem:[%s2460 + $0x190] sm:$0xff] %v2495
                %v2497 = vld [vmem:[%s2459 + $0x1c8] sm:$0xff]
                %2498 = vst [vmem:[%s2460 + $0x1c8] sm:$0xff] %v2497
                %v2499 = vld [vmem:[%s2459 + $0x200] sm:$0xff]
                %2500 = vst [vmem:[%s2460 + $0x200] sm:$0xff] %v2499
                %v2501 = vld [vmem:[%s2459 + $0x10] sm:$0xff]
                %2502 = vst [vmem:[%s2460 + $0x10] sm:$0xff] %v2501
                %v2503 = vld [vmem:[%s2459 + $0x48] sm:$0xff]
                %2504 = vst [vmem:[%s2460 + $0x48] sm:$0xff] %v2503
                %v2505 = vld [vmem:[%s2459 + $0x80] sm:$0xff]
                %2506 = vst [vmem:[%s2460 + $0x80] sm:$0xff] %v2505
                %v2507 = vld [vmem:[%s2459 + $0xb8] sm:$0xff]
                %2508 = vst [vmem:[%s2460 + $0xb8] sm:$0xff] %v2507
                %v2509 = vld [vmem:[%s2459 + $0xf0] sm:$0xff]
                %2510 = vst [vmem:[%s2460 + $0xf0] sm:$0xff] %v2509
                %v2511 = vld [vmem:[%s2459 + $0x128] sm:$0xff]
                %2512 = vst [vmem:[%s2460 + $0x128] sm:$0xff] %v2511
                %v2513 = vld [vmem:[%s2459 + $0x160] sm:$0xff]
                %2514 = vst [vmem:[%s2460 + $0x160] sm:$0xff] %v2513
                %v2515 = vld [vmem:[%s2459 + $0x198] sm:$0xff]
                %2516 = vst [vmem:[%s2460 + $0x198] sm:$0xff] %v2515
                %v2517 = vld [vmem:[%s2459 + $0x1d0] sm:$0xff]
                %2518 = vst [vmem:[%s2460 + $0x1d0] sm:$0xff] %v2517
                %v2519 = vld [vmem:[%s2459 + $0x208] sm:$0xff]
                %2520 = vst [vmem:[%s2460 + $0x208] sm:$0xff] %v2519
                %v2521 = vld [vmem:[%s2459 + $0x18] sm:$0xff]
                %2522 = vst [vmem:[%s2460 + $0x18] sm:$0xff] %v2521
                %v2523 = vld [vmem:[%s2459 + $0x50] sm:$0xff]
                %2524 = vst [vmem:[%s2460 + $0x50] sm:$0xff] %v2523
                %v2525 = vld [vmem:[%s2459 + $0x88] sm:$0xff]
                %2526 = vst [vmem:[%s2460 + $0x88] sm:$0xff] %v2525
                %v2527 = vld [vmem:[%s2459 + $0xc0] sm:$0xff]
                %2528 = vst [vmem:[%s2460 + $0xc0] sm:$0xff] %v2527
                %v2529 = vld [vmem:[%s2459 + $0xf8] sm:$0xff]
                %2530 = vst [vmem:[%s2460 + $0xf8] sm:$0xff] %v2529
                %v2531 = vld [vmem:[%s2459 + $0x130] sm:$0xff]
                %2532 = vst [vmem:[%s2460 + $0x130] sm:$0xff] %v2531
                %v2533 = vld [vmem:[%s2459 + $0x168] sm:$0xff]
                %2534 = vst [vmem:[%s2460 + $0x168] sm:$0xff] %v2533
                %v2535 = vld [vmem:[%s2459 + $0x1a0] sm:$0xff]
                %2536 = vst [vmem:[%s2460 + $0x1a0] sm:$0xff] %v2535
                %v2537 = vld [vmem:[%s2459 + $0x1d8] sm:$0xff]
                %2538 = vst [vmem:[%s2460 + $0x1d8] sm:$0xff] %v2537
                %v2539 = vld [vmem:[%s2459 + $0x210] sm:$0xff]
                %2540 = vst [vmem:[%s2460 + $0x210] sm:$0xff] %v2539
                %v2541 = vld [vmem:[%s2459 + $0x20] sm:$0xff]
                %2542 = vst [vmem:[%s2460 + $0x20] sm:$0xff] %v2541
                %v2543 = vld [vmem:[%s2459 + $0x58] sm:$0xff]
                %2544 = vst [vmem:[%s2460 + $0x58] sm:$0xff] %v2543
                %v2545 = vld [vmem:[%s2459 + $0x90] sm:$0xff]
                %2546 = vst [vmem:[%s2460 + $0x90] sm:$0xff] %v2545
                %v2547 = vld [vmem:[%s2459 + $0xc8] sm:$0xff]
                %2548 = vst [vmem:[%s2460 + $0xc8] sm:$0xff] %v2547
                %v2549 = vld [vmem:[%s2459 + $0x100] sm:$0xff]
                %2550 = vst [vmem:[%s2460 + $0x100] sm:$0xff] %v2549
                %v2551 = vld [vmem:[%s2459 + $0x138] sm:$0xff]
                %2552 = vst [vmem:[%s2460 + $0x138] sm:$0xff] %v2551
                %v2553 = vld [vmem:[%s2459 + $0x170] sm:$0xff]
                %2554 = vst [vmem:[%s2460 + $0x170] sm:$0xff] %v2553
                %v2555 = vld [vmem:[%s2459 + $0x1a8] sm:$0xff]
                %2556 = vst [vmem:[%s2460 + $0x1a8] sm:$0xff] %v2555
                %v2557 = vld [vmem:[%s2459 + $0x1e0] sm:$0xff]
                %2558 = vst [vmem:[%s2460 + $0x1e0] sm:$0xff] %v2557
                %v2559 = vld [vmem:[%s2459 + $0x218] sm:$0xff]
                %2560 = vst [vmem:[%s2460 + $0x218] sm:$0xff] %v2559
                %v2561 = vld [vmem:[%s2459 + $0x28] sm:$0xff]
                %2562 = vst [vmem:[%s2460 + $0x28] sm:$0xff] %v2561
                %v2563 = vld [vmem:[%s2459 + $0x60] sm:$0xff]
                %2564 = vst [vmem:[%s2460 + $0x60] sm:$0xff] %v2563
                %v2565 = vld [vmem:[%s2459 + $0x98] sm:$0xff]
                %2566 = vst [vmem:[%s2460 + $0x98] sm:$0xff] %v2565
                %v2567 = vld [vmem:[%s2459 + $0xd0] sm:$0xff]
                %2568 = vst [vmem:[%s2460 + $0xd0] sm:$0xff] %v2567
                %v2569 = vld [vmem:[%s2459 + $0x108] sm:$0xff]
                %2570 = vst [vmem:[%s2460 + $0x108] sm:$0xff] %v2569
                %v2571 = vld [vmem:[%s2459 + $0x140] sm:$0xff]
                %2572 = vst [vmem:[%s2460 + $0x140] sm:$0xff] %v2571
                %v2573 = vld [vmem:[%s2459 + $0x178] sm:$0xff]
                %2574 = vst [vmem:[%s2460 + $0x178] sm:$0xff] %v2573
                %v2575 = vld [vmem:[%s2459 + $0x1b0] sm:$0xff]
                %2576 = vst [vmem:[%s2460 + $0x1b0] sm:$0xff] %v2575
                %v2577 = vld [vmem:[%s2459 + $0x1e8] sm:$0xff]
                %2578 = vst [vmem:[%s2460 + $0x1e8] sm:$0xff] %v2577
                %v2579 = vld [vmem:[%s2459 + $0x220] sm:$0xff]
                %2580 = vst [vmem:[%s2460 + $0x220] sm:$0xff] %v2579
                %v2581 = vld [vmem:[%s2459 + $0x30] sm:$0xff]
                %2582 = vst [vmem:[%s2460 + $0x30] sm:$0xff] %v2581
                %v2583 = vld [vmem:[%s2459 + $0x68] sm:$0xff]
                %2584 = vst [vmem:[%s2460 + $0x68] sm:$0xff] %v2583
                %v2585 = vld [vmem:[%s2459 + $0xa0] sm:$0xff]
                %2586 = vst [vmem:[%s2460 + $0xa0] sm:$0xff] %v2585
                %v2587 = vld [vmem:[%s2459 + $0xd8] sm:$0xff]
                %2588 = vst [vmem:[%s2460 + $0xd8] sm:$0xff] %v2587
                %v2589 = vld [vmem:[%s2459 + $0x110] sm:$0xff]
                %2590 = vst [vmem:[%s2460 + $0x110] sm:$0xff] %v2589
                %v2591 = vld [vmem:[%s2459 + $0x148] sm:$0xff]
                %2592 = vst [vmem:[%s2460 + $0x148] sm:$0xff] %v2591
                %v2593 = vld [vmem:[%s2459 + $0x180] sm:$0xff]
                %2594 = vst [vmem:[%s2460 + $0x180] sm:$0xff] %v2593
                %v2595 = vld [vmem:[%s2459 + $0x1b8] sm:$0xff]
                %2596 = vst [vmem:[%s2460 + $0x1b8] sm:$0xff] %v2595
                %v2597 = vld [vmem:[%s2459 + $0x1f0] sm:$0xff]
                %2598 = vst [vmem:[%s2460 + $0x1f0] sm:$0xff] %v2597
                %v2599 = vld [vmem:[%s2459 + $0x228] sm:$0xff]
                %2600 = vst [vmem:[%s2460 + $0x228] sm:$0xff] %v2599
                %s2601 = sadd.s32 1, %s2458
                %p2602 = scmp.ge.s32.totalorder %s2601, %s2450
                %s2603 = scalar_select %p2602, 0, %s2601
                %s2604 = smul.u32 %s2603, 560
                %s2605 = smul.u32 %s2603, 560
                %s2606 = scalar_lea.vmem %s2431, %s2604 [#allocation2]
                %s2607 = scalar_lea.vmem %s2444, %s2605
              $region49: #{bn_add_relu.1} parent=43 // loop_footer
                %s2455 = sadd.s32 %s2453, 1
              $region50: #{bn_add_relu.1} parent=43 // loop_footer_branch
                %2452 = sbr.rel target = $region46
              $region51: #{bn_add_relu.1} parent=43 // loop_exit
                _
              %s2608 = sdiv.u32.pop %s2438, 10
              %s2609 = srem.u32.pop %s2438, 10
              %s2610 = smul.u32 %s2608, 10
              %s2611 = smul.u32 56, %s2610
              %s2612 = scalar_lea.vmem %s2431, %s2611 [#allocation2]
              %s2613 = smul.u32 56, %s2610
              %s2614 = scalar_lea.vmem %s2444, %s2613
              // While loop
              $region52: #{bn_add_relu.1} parent=43 // loop_pre_header
                _
              $region53: #{bn_add_relu.1} parent=43 // loop_header
                %s2616 = sphi 0, %s2618
                %p2617 = scmp.ge.s32.totalorder %s2616, %s2609
                %s2621 = sphi 0, %s2640
                %s2622 = sphi %s2612, %s2643
                %s2623 = sphi %s2614, %s2644
              $region54: #{bn_add_relu.1} parent=43 // loop_header_branch
                %2620 = sbr.rel (%p2617) target = $region58
              $region55: #{bn_add_relu.1} parent=43 // loop_body
                %v2624 = vld [vmem:[%s2622] sm:$0xff]
                %2625 = vst [vmem:[%s2623] sm:$0xff] %v2624
                %v2626 = vld [vmem:[%s2622 + $0x8] sm:$0xff]
                %2627 = vst [vmem:[%s2623 + $0x8] sm:$0xff] %v2626
                %v2628 = vld [vmem:[%s2622 + $0x10] sm:$0xff]
                %2629 = vst [vmem:[%s2623 + $0x10] sm:$0xff] %v2628
                %v2630 = vld [vmem:[%s2622 + $0x18] sm:$0xff]
                %2631 = vst [vmem:[%s2623 + $0x18] sm:$0xff] %v2630
                %v2632 = vld [vmem:[%s2622 + $0x20] sm:$0xff]
                %2633 = vst [vmem:[%s2623 + $0x20] sm:$0xff] %v2632
                %v2634 = vld [vmem:[%s2622 + $0x28] sm:$0xff]
                %2635 = vst [vmem:[%s2623 + $0x28] sm:$0xff] %v2634
                %v2636 = vld [vmem:[%s2622 + $0x30] sm:$0xff]
                %2637 = vst [vmem:[%s2623 + $0x30] sm:$0xff] %v2636
                %s2638 = sadd.s32 1, %s2621
                %p2639 = scmp.ge.s32.totalorder %s2638, %s2609
                %s2640 = scalar_select %p2639, 0, %s2638
                %s2641 = smul.u32 %s2640, 56
                %s2642 = smul.u32 %s2640, 56
                %s2643 = scalar_lea.vmem %s2612, %s2641 [#allocation2]
                %s2644 = scalar_lea.vmem %s2614, %s2642
              $region56: #{bn_add_relu.1} parent=43 // loop_footer
                %s2618 = sadd.s32 %s2616, 1
              $region57: #{bn_add_relu.1} parent=43 // loop_footer_branch
                %2615 = sbr.rel target = $region53
              $region58: #{bn_add_relu.1} parent=43 // loop_exit
                _
            $region44: #{bn_add_relu.1} parent=39 // pred_fallthru
              _
            // Predicated region
            $region59: #{bn_add_relu.1} parent=39 // pred_check
              _
            $region60: #{bn_add_relu.1} parent=39 // pred_check_branch
              %2646 = sbr.rel target = $region62
            $region61: #{bn_add_relu.1} parent=39 // pred_region
              _
            $region62: #{bn_add_relu.1} parent=39 // pred_fallthru
              _
          $region40: #{bn_add_relu.1} parent=35 // pred_fallthru
            _
          %2647 = vnop
        $region36: #{bn_add_relu.1} parent=31 // pred_fallthru
          _
      $region32: #{bn_add_relu.1} parent=5 // pred_fallthru
        _
      %p2648 = scmp.le.s32.totalorder 2, %s9
      // Predicated region
      $region63: #{bn_add_relu.1} parent=5 // pred_check
        %p2649 = pneg %p2648
      $region64: #{bn_add_relu.1} parent=5 // pred_check_branch
        %2651 = sbr.rel (%p2649) target = $region66
      $region65: #{bn_add_relu.1} parent=5 // pred_region
        %s2652 = ssub.s32 %s9, 2
        // Predicated region
        $region67: #{bn_add_relu.1} parent=65 // pred_check
          %p2653 = pneg %p116
        $region68: #{bn_add_relu.1} parent=65 // pred_check_branch
          %2655 = sbr.rel (%p2653) target = $region70
        $region69: #{bn_add_relu.1} parent=65 // pred_region
          %s2656 = sand.u32 %s101, 1
          %s2657 = sand.u32 %s101, 1
          %s2658 = smul.addr %s2657, 1232
          %s2659 = scalar_lea.vmem [#allocation2], %s2658
        $region70: #{bn_add_relu.1} parent=65 // pred_fallthru
          _
      $region66: #{bn_add_relu.1} parent=5 // pred_fallthru
        _
    $region6: #{bn_add_relu.1} parent=1 // loop_footer
      %s13 = sadd.s32 1, %s9
    $region7: #{bn_add_relu.1} parent=1 // loop_footer_branch
      %8 = sbr.rel target = $region3
    $region8: #{bn_add_relu.1} parent=1 // loop_exit
      _

</llo_original>
